<compile_context>
chip_gen: v5e
topology: v5e:2x2
jax: 0.10.0
libtpu: 0.0.40
codegen_flags: <defaults>
</compile_context>

<pallas_src>
import jax
import jax.numpy as jnp
from jax import lax
from jax.experimental import pallas as pl
from jax.experimental.pallas import tpu as pltpu

EPS_COS = 1e-8   # torch.cosine_similarity default eps
EPS_BN = 1e-5    # nn.BatchNorm1d default eps


def _round_up(x, m):
    return ((x + m - 1) // m) * m


def _crossmodal_head_kernel(text_ref, pos_ref, neg_ref,
                            wd_ref, bd_ref, wr_ref, br_ref,
                            out_ref):
    # text branch: tanh(text @ Wd' + bd')   (eval-mode BN folded into Wd'/bd')
    t = jnp.dot(text_ref[...].astype(jnp.bfloat16), wd_ref[...],
                preferred_element_type=jnp.float32)
    t = jnp.tanh(t + bd_ref[...])

    # pos / neg image branches share the bf16, VMEM-resident resnet weight.
    # Two separate dots: no concat copy in VMEM, no wrapper-side stacking.
    p = jnp.dot(pos_ref[...].astype(jnp.bfloat16), wr_ref[...],
                preferred_element_type=jnp.float32)
    p = jnp.tanh(p + br_ref[...])
    n = jnp.dot(neg_ref[...].astype(jnp.bfloat16), wr_ref[...],
                preferred_element_type=jnp.float32)
    n = jnp.tanh(n + br_ref[...])

    # cosine similarity along the hidden axis with torch eps semantics:
    #   dot / max(|a|*|b|, eps) == dot * rsqrt(max(|a|^2 * |b|^2, eps^2))
    tt = jnp.sum(t * t, axis=-1)
    pp = jnp.sum(p * p, axis=-1)
    nn = jnp.sum(n * n, axis=-1)
    tp = jnp.sum(t * p, axis=-1)
    tn = jnp.sum(t * n, axis=-1)

    eps2 = jnp.float32(EPS_COS * EPS_COS)
    left = tp * lax.rsqrt(jnp.maximum(tt * pp, eps2))     # (tb,)
    right = tn * lax.rsqrt(jnp.maximum(tt * nn, eps2))    # (tb,)

    # lane-dense (2, tb) output block -> one contiguous, unmasked writeback
    out_ref[...] = jnp.stack([left, right], axis=0)


def crossmodal_head(text_feat, pos_feat, neg_feat, params, *, block_b=512):
    """text_feat: (B, E); pos/neg_feat: (B, D).  Returns (left, right): (B,)."""
    B, E = text_feat.shape
    D = pos_feat.shape[1]
    H = params["wd"].shape[1]

    # Batch tiling.  Block-shape rules: for the (2, B) output the batch tile
    # is the lane dim -> tb must be a multiple of 128 or cover all of B; for
    # the activations tb is the sublane dim -> multiple of 8 or all of B.
    if B <= 128:
        tb = B                                   # one tile covers the batch
    else:
        # multiple of 128; aim for >= 2 grid steps (v7x has 2 TensorCores)
        tb = min(block_b, _round_up(pl.cdiv(B, 2), 128))
    grid_b = pl.cdiv(B, tb)                      # tail tile is OOB-masked

    row = lambda i: (i, 0)      # activation tiles follow the grid
    col = lambda i: (0, i)      # output tiles follow the grid along lanes
    const = lambda i: (0, 0)    # weights: constant block -> stay in VMEM

    compiler_kwargs = dict(dimension_semantics=("parallel",))
    if tb > 256:
        # big tiles: raise v5e's 16 MiB default scoped-VMEM limit explicitly
        compiler_kwargs["vmem_limit_bytes"] = 32 * 1024 * 1024

    out = pl.pallas_call(
        _crossmodal_head_kernel,
        grid=(grid_b,),
        in_specs=[
            pl.BlockSpec((tb, E), row),
            pl.BlockSpec((tb, D), row),
            pl.BlockSpec((tb, D), row),
            pl.BlockSpec((E, H), const),
            pl.BlockSpec((1, H), const),
            pl.BlockSpec((D, H), const),
            pl.BlockSpec((1, H), const),
        ],
        out_specs=pl.BlockSpec((2, tb), col),
        out_shape=jax.ShapeDtypeStruct((2, B), jnp.float32),
        compiler_params=pltpu.CompilerParams(**compiler_kwargs),
    )(text_feat, pos_feat, neg_feat,
      params["wd"], params["bd"], params["wr"], params["br"])

    return out[0], out[1]


def make_params(key, embed_size=128, img_feat=512, hidden_size=512):
    """Synthetic parameters (no checkpoint load), PyTorch-equivalent layout.

    Linear weights are stored transposed (in, out) so the kernel computes
    x @ W.  BatchNorm1d eval-mode running stats are expressed as a per-channel
    scale/shift: scale = gamma / sqrt(var + eps), shift = beta - mean * scale.
    """
    ks = jax.random.split(key, 12)

    def linear(kw, kb, fan_in, fan_out):
        bound = 1.0 / jnp.sqrt(fan_in)
        w = jax.random.uniform(kw, (fan_in, fan_out), jnp.float32, -bound, bound)
        b = jax.random.uniform(kb, (1, fan_out), jnp.float32, -bound, bound)
        return w, b

    def bn(kg, kb, km, kv, n):
        gamma = 1.0 + 0.1 * jax.random.normal(kg, (1, n), jnp.float32)
        beta = 0.1 * jax.random.normal(kb, (1, n), jnp.float32)
        mean = 0.1 * jax.random.normal(km, (1, n), jnp.float32)
        var = jnp.abs(1.0 + 0.1 * jax.random.normal(kv, (1, n), jnp.float32))
        scale = gamma / jnp.sqrt(var + EPS_BN)
        shift = beta - mean * scale
        return scale, shift

    wd, bd = linear(ks[0], ks[1], embed_size, hidden_size)    # dssm_linear
    wr, br = linear(ks[2], ks[3], img_feat, hidden_size)      # resnet_linear
    sd, od = bn(ks[4], ks[5], ks[6], ks[7], hidden_size)      # dssm_bn (eval)
    sr, orr = bn(ks[8], ks[9], ks[10], ks[11], hidden_size)   # resnet_bn (eval)

    return {"wd": wd, "bd": bd, "sd": sd, "od": od,
            "wr": wr, "br": br, "sr": sr, "or": orr}


def fold_bn_params(raw):
    """Fold eval-mode BatchNorm into the linears; cast weights to bf16.

    BN(x @ W + b) = x @ (W * s) + (b * s + o).  Weights go to bf16 (MXU-native,
    half the HBM traffic); the folded biases stay f32 and are added to the f32
    MXU accumulator.
    """
    wd = (raw["wd"] * raw["sd"]).astype(jnp.bfloat16)
    bd = (raw["bd"] * raw["sd"] + raw["od"]).astype(jnp.float32)
    wr = (raw["wr"] * raw["sr"]).astype(jnp.bfloat16)
    br = (raw["br"] * raw["sr"] + raw["or"]).astype(jnp.float32)
    return {"wd": wd, "bd": bd, "wr": wr, "br": br}


if __name__ == "__main__":
    key = jax.random.PRNGKey(0)
    k_txt, k_pos, k_neg, k_par = jax.random.split(key, 4)

    B, E, D, H = 8, 128, 512, 512   # batch, embed_size, resnet.fc.in_features, hidden

    # stand-ins for dssm.predict(query) and resnet(img).reshape(B, -1)
    # (if the upstream extractors can emit bf16, these could be fed as bf16 to
    #  halve activation HBM traffic; kept f32 to match the torch module here)
    text_feat = jax.random.normal(k_txt, (B, E), jnp.float32)
    pos_feat = jax.random.normal(k_pos, (B, D), jnp.float32)
    neg_feat = jax.random.normal(k_neg, (B, D), jnp.float32)

    params = fold_bn_params(
        make_params(k_par, embed_size=E, img_feat=D, hidden_size=H))

    left, right = crossmodal_head(text_feat, pos_feat, neg_feat, params)
    jax.block_until_ready((left, right))

    # pure-JAX reference mirroring the kernel numerics (bf16-folded weights,
    # bf16 matmul inputs, f32 accumulate) so the tolerance stays tight.
    # Note: vs. the all-f32 torch head the bf16 weights/activations introduce
    # slightly larger (intentional) error than this 2e-3 check implies.
    def ref():
        def branch(x, w, b):
            y = jnp.dot(x.astype(jnp.bfloat16), w,
                        preferred_element_type=jnp.float32)
            return jnp.tanh(y + b)

        t = branch(text_feat, params["wd"], params["bd"])
        p = branch(pos_feat, params["wr"], params["br"])
        n = branch(neg_feat, params["wr"], params["br"])

        def cos(a, b):
            num = jnp.sum(a * b, axis=-1)
            den = jnp.maximum(jnp.linalg.norm(a, axis=-1)
                              * jnp.linalg.norm(b, axis=-1), EPS_COS)
            return num / den

        return cos(t, p), cos(t, n)

    l_ref, r_ref = ref()
    assert jnp.allclose(left, l_ref, atol=2e-3, rtol=2e-3)
    assert jnp.allclose(right, r_ref, atol=2e-3, rtol=2e-3)
    print("KERNEL_OK")
</pallas_src>

<mosaic_0001>
module attributes {stable_mosaic.version = 11 : i64} {
  func.func @_crossmodal_head_kernel(%arg0: i32, %arg1: memref<8x128xf32, #tpu.memory_space<vmem>>, %arg2: memref<8x512xf32, #tpu.memory_space<vmem>>, %arg3: memref<8x512xf32, #tpu.memory_space<vmem>>, %arg4: memref<128x512xbf16, #tpu.memory_space<vmem>>, %arg5: memref<1x512xf32, #tpu.memory_space<vmem>>, %arg6: memref<512x512xbf16, #tpu.memory_space<vmem>>, %arg7: memref<1x512xf32, #tpu.memory_space<vmem>>, %arg8: memref<2x8xf32, #tpu.memory_space<vmem>>) attributes {dimension_semantics = [#tpu.dimension_semantics<parallel>], iteration_bounds = array<i64: 1>, scalar_prefetch = 0 : i64, scratch_operands = 0 : i64, tpu.core_type = #tpu.core_type<tc>, window_params = [{transform_indices = @transform_0, window_bounds = array<i64: 8, 128>}, {transform_indices = @transform_1, window_bounds = array<i64: 8, 512>}, {transform_indices = @transform_2, window_bounds = array<i64: 8, 512>}, {pipeline_mode = #tpu.pipeline_mode<synchronous>, transform_indices = @transform_3, window_bounds = array<i64: 128, 512>}, {pipeline_mode = #tpu.pipeline_mode<synchronous>, transform_indices = @transform_4, window_bounds = array<i64: 1, 512>}, {pipeline_mode = #tpu.pipeline_mode<synchronous>, transform_indices = @transform_5, window_bounds = array<i64: 512, 512>}, {pipeline_mode = #tpu.pipeline_mode<synchronous>, transform_indices = @transform_6, window_bounds = array<i64: 1, 512>}, {transform_indices = @transform_7, window_bounds = array<i64: 2, 8>}]} {
    %c0 = arith.constant 0 : index
    %c0_0 = arith.constant 0 : index
    %0 = vector.load %arg1[%c0, %c0_0] : memref<8x128xf32, #tpu.memory_space<vmem>>, vector<8x128xf32>
    %1 = arith.truncf %0 : vector<8x128xf32> to vector<8x128xbf16>
    %c0_1 = arith.constant 0 : index
    %c0_2 = arith.constant 0 : index
    %2 = vector.load %arg4[%c0_1, %c0_2] : memref<128x512xbf16, #tpu.memory_space<vmem>>, vector<128x512xbf16>
    %cst = arith.constant dense<0.000000e+00> : vector<8x512xf32>
    %3 = tpu.matmul %1, %2, %cst {dimension_numbers = #tpu.dot_dimension_numbers<[1], [0], [0], [1], [0, 0, 1, 1], [], []>} : vector<8x128xbf16>, vector<128x512xbf16>, vector<8x512xf32> -> vector<8x512xf32>
    %c0_3 = arith.constant 0 : index
    %c0_4 = arith.constant 0 : index
    %4 = vector.load %arg5[%c0_3, %c0_4] : memref<1x512xf32, #tpu.memory_space<vmem>>, vector<1x512xf32>
    %5 = vector.broadcast %4 : vector<1x512xf32> to vector<8x512xf32>
    %6 = arith.addf %3, %5 : vector<8x512xf32>
    %7 = math.tanh %6 : vector<8x512xf32>
    %c0_5 = arith.constant 0 : index
    %c0_6 = arith.constant 0 : index
    %8 = vector.load %arg2[%c0_5, %c0_6] : memref<8x512xf32, #tpu.memory_space<vmem>>, vector<8x512xf32>
    %9 = arith.truncf %8 : vector<8x512xf32> to vector<8x512xbf16>
    %c0_7 = arith.constant 0 : index
    %c0_8 = arith.constant 0 : index
    %10 = vector.load %arg6[%c0_7, %c0_8] : memref<512x512xbf16, #tpu.memory_space<vmem>>, vector<512x512xbf16>
    %cst_9 = arith.constant dense<0.000000e+00> : vector<8x512xf32>
    %11 = tpu.matmul %9, %10, %cst_9 {dimension_numbers = #tpu.dot_dimension_numbers<[1], [0], [0], [1], [0, 0, 1, 1], [], []>} : vector<8x512xbf16>, vector<512x512xbf16>, vector<8x512xf32> -> vector<8x512xf32>
    %c0_10 = arith.constant 0 : index
    %c0_11 = arith.constant 0 : index
    %12 = vector.load %arg7[%c0_10, %c0_11] : memref<1x512xf32, #tpu.memory_space<vmem>>, vector<1x512xf32>
    %13 = vector.broadcast %12 : vector<1x512xf32> to vector<8x512xf32>
    %14 = arith.addf %11, %13 : vector<8x512xf32>
    %15 = math.tanh %14 : vector<8x512xf32>
    %c0_12 = arith.constant 0 : index
    %c0_13 = arith.constant 0 : index
    %16 = vector.load %arg3[%c0_12, %c0_13] : memref<8x512xf32, #tpu.memory_space<vmem>>, vector<8x512xf32>
    %17 = arith.truncf %16 : vector<8x512xf32> to vector<8x512xbf16>
    %c0_14 = arith.constant 0 : index
    %c0_15 = arith.constant 0 : index
    %18 = vector.load %arg6[%c0_14, %c0_15] : memref<512x512xbf16, #tpu.memory_space<vmem>>, vector<512x512xbf16>
    %cst_16 = arith.constant dense<0.000000e+00> : vector<8x512xf32>
    %19 = tpu.matmul %17, %18, %cst_16 {dimension_numbers = #tpu.dot_dimension_numbers<[1], [0], [0], [1], [0, 0, 1, 1], [], []>} : vector<8x512xbf16>, vector<512x512xbf16>, vector<8x512xf32> -> vector<8x512xf32>
    %c0_17 = arith.constant 0 : index
    %c0_18 = arith.constant 0 : index
    %20 = vector.load %arg7[%c0_17, %c0_18] : memref<1x512xf32, #tpu.memory_space<vmem>>, vector<1x512xf32>
    %21 = vector.broadcast %20 : vector<1x512xf32> to vector<8x512xf32>
    %22 = arith.addf %19, %21 : vector<8x512xf32>
    %23 = math.tanh %22 : vector<8x512xf32>
    %24 = arith.mulf %7, %7 : vector<8x512xf32>
    %cst_19 = arith.constant dense<0.000000e+00> : vector<8xf32>
    %25 = vector.multi_reduction <add>, %24, %cst_19 [1] : vector<8x512xf32> to vector<8xf32>
    %26 = arith.mulf %15, %15 : vector<8x512xf32>
    %cst_20 = arith.constant dense<0.000000e+00> : vector<8xf32>
    %27 = vector.multi_reduction <add>, %26, %cst_20 [1] : vector<8x512xf32> to vector<8xf32>
    %28 = arith.mulf %23, %23 : vector<8x512xf32>
    %cst_21 = arith.constant dense<0.000000e+00> : vector<8xf32>
    %29 = vector.multi_reduction <add>, %28, %cst_21 [1] : vector<8x512xf32> to vector<8xf32>
    %30 = arith.mulf %7, %15 : vector<8x512xf32>
    %cst_22 = arith.constant dense<0.000000e+00> : vector<8xf32>
    %31 = vector.multi_reduction <add>, %30, %cst_22 [1] : vector<8x512xf32> to vector<8xf32>
    %32 = arith.mulf %7, %23 : vector<8x512xf32>
    %cst_23 = arith.constant dense<0.000000e+00> : vector<8xf32>
    %33 = vector.multi_reduction <add>, %32, %cst_23 [1] : vector<8x512xf32> to vector<8xf32>
    %34 = arith.mulf %25, %27 : vector<8xf32>
    %cst_24 = arith.constant 1.000000e-16 : f32
    %35 = vector.broadcast %cst_24 : f32 to vector<8xf32>
    %36 = arith.maximumf %34, %35 : vector<8xf32>
    %37 = math.rsqrt %36 : vector<8xf32>
    %38 = arith.mulf %31, %37 : vector<8xf32>
    %39 = arith.mulf %25, %29 : vector<8xf32>
    %cst_25 = arith.constant 1.000000e-16 : f32
    %40 = vector.broadcast %cst_25 : f32 to vector<8xf32>
    %41 = arith.maximumf %39, %40 : vector<8xf32>
    %42 = math.rsqrt %41 : vector<8xf32>
    %43 = arith.mulf %33, %42 : vector<8xf32>
    %44 = vector.shape_cast %38 : vector<8xf32> to vector<1x8xf32>
    %45 = vector.shape_cast %43 : vector<8xf32> to vector<1x8xf32>
    %46 = tpu.concatenate %44, %45 in 0 : vector<1x8xf32>, vector<1x8xf32> -> vector<2x8xf32>
    %c0_26 = arith.constant 0 : index
    %c0_27 = arith.constant 0 : index
    %47 = vector.load %arg8[%c0_26, %c0_27] : memref<2x8xf32, #tpu.memory_space<vmem>>, vector<2x8xf32>
    tpu.vector_store %arg8[%c0_26, %c0_27], %46 {strides = array<i32>} : memref<2x8xf32, #tpu.memory_space<vmem>>, vector<2x8xf32>,
    return
  }
  func.func @transform_0(%arg0: i32) -> (i32, i32) {
    %c0_i32 = arith.constant 0 : i32
    %c0_i32_0 = arith.constant 0 : i32
    return %arg0, %c0_i32 : i32, i32
  }
  func.func @transform_1(%arg0: i32) -> (i32, i32) {
    %c0_i32 = arith.constant 0 : i32
    %c0_i32_0 = arith.constant 0 : i32
    return %arg0, %c0_i32 : i32, i32
  }
  func.func @transform_2(%arg0: i32) -> (i32, i32) {
    %c0_i32 = arith.constant 0 : i32
    %c0_i32_0 = arith.constant 0 : i32
    return %arg0, %c0_i32 : i32, i32
  }
  func.func @transform_3(%arg0: i32) -> (i32, i32) {
    %c0_i32 = arith.constant 0 : i32
    %c0_i32_0 = arith.constant 0 : i32
    %c0_i32_1 = arith.constant 0 : i32
    return %c0_i32, %c0_i32_0 : i32, i32
  }
  func.func @transform_4(%arg0: i32) -> (i32, i32) {
    %c0_i32 = arith.constant 0 : i32
    %c0_i32_0 = arith.constant 0 : i32
    %c0_i32_1 = arith.constant 0 : i32
    return %c0_i32, %c0_i32_0 : i32, i32
  }
  func.func @transform_5(%arg0: i32) -> (i32, i32) {
    %c0_i32 = arith.constant 0 : i32
    %c0_i32_0 = arith.constant 0 : i32
    %c0_i32_1 = arith.constant 0 : i32
    return %c0_i32, %c0_i32_0 : i32, i32
  }
  func.func @transform_6(%arg0: i32) -> (i32, i32) {
    %c0_i32 = arith.constant 0 : i32
    %c0_i32_0 = arith.constant 0 : i32
    %c0_i32_1 = arith.constant 0 : i32
    return %c0_i32, %c0_i32_0 : i32, i32
  }
  func.func @transform_7(%arg0: i32) -> (i32, i32) {
    %c0_i32 = arith.constant 0 : i32
    %c0_i32_0 = arith.constant 0 : i32
    return %c0_i32, %arg0 : i32, i32
  }
}

</mosaic_0001>

<llo_original>
// kernel: tpu_custom_call.1
$region0: #{tpu_custom_call.1}
  #allocation0 [shape = 'u32[]', space=smem, size = 0x4, offset = 0x4, fixed_abs, tag = 'smem constant byte address 0x4 - core index']
  #allocation1 [shape = 'u32[72,128]{1,0:T(1,128)}', space=vmem, size = 0x9000, scoped, tag = 'internal scratch']
  %s0 = inlined_call_operand.hbm [shape: f32[8,128], index: 0, kind: input, shape index: {}]
  %s1 = inlined_call_operand.hbm [shape: f32[8,512], index: 1, kind: input, shape index: {}]
  %s2 = inlined_call_operand.hbm [shape: f32[8,512], index: 2, kind: input, shape index: {}]
  %s3 = inlined_call_operand.hbm [shape: bf16[128,512], index: 3, kind: input, shape index: {}]
  %s4 = inlined_call_operand.hbm [shape: f32[1,512], index: 4, kind: input, shape index: {}]
  %s5 = inlined_call_operand.hbm [shape: bf16[512,512], index: 5, kind: input, shape index: {}]
  %s6 = inlined_call_operand.vmem [shape: f32[1,512], index: 6, kind: input, shape index: {}]
  %s7 = inlined_call_operand.hbm [shape: f32[2,8], index: 7, kind: output, shape index: {}]
  %s8 = sld [smem:[#allocation0]]
  $region62: #{tpu_custom_call.1} parent=0
    _
  %s10 = ssub.s32 1, %s8
  %s11 = scalar_select 0, %s10, %s8
  $region1: #{tpu_custom_call.1} parent=0
    #allocation2 [shape = 'u8[4096]{0}', space=vmem, size = 0x1000, scoped, tag = 'input window, operand 0, single buffered']
    #allocation3 [shape = 's32[1]{0}', space=sflag, size = 0x4, scoped, tag = 'scoped memory for tpu_custom_call.1']
    #allocation4 [shape = 's32[1]{0}', space=sflag, size = 0x4, scoped, tag = 'scoped memory for tpu_custom_call.1']
    #allocation5 [shape = 'u8[16384]{0}', space=vmem, size = 0x4000, scoped, tag = 'input window, operand 1, single buffered']
    #allocation6 [shape = 's32[1]{0}', space=sflag, size = 0x4, scoped, tag = 'scoped memory for tpu_custom_call.1']
    #allocation7 [shape = 'u8[16384]{0}', space=vmem, size = 0x4000, scoped, tag = 'input window, operand 2, single buffered']
    #allocation8 [shape = 'u8[131072]{0}', space=vmem, size = 0x20000, scoped, tag = 'input window, operand 3, single buffered']
    #allocation9 [shape = 's32[1]{0}', space=sflag, size = 0x4, scoped, tag = 'scoped memory for tpu_custom_call.1']
    #allocation10 [shape = 'u8[2048]{0}', space=vmem, size = 0x800, scoped, tag = 'input window, operand 4, single buffered']
    #allocation11 [shape = 'u8[524288]{0}', space=vmem, size = 0x80000, scoped, tag = 'input window, operand 5, single buffered']
    #allocation12 [shape = 's32[1]{0}', space=sflag, size = 0x4, scoped, tag = 'scoped memory for tpu_custom_call.1']
    #allocation13 [shape = 'u8[1024]{0}', space=vmem, size = 0x400, scoped, tag = 'output window, operand 0, single buffered']
    %12 = vsyncpa [#allocation3], 0
    %13 = vsyncpa [#allocation6], 0
    %14 = vsyncpa [#allocation9], 0
    %15 = vsyncpa [#allocation12], 0
    %16 = vsyncpa [#allocation4], 0
    // Predicated region
    $region2: #{tpu_custom_call.1} parent=1 // pred_check
      _
    $region3: #{tpu_custom_call.1} parent=1 // pred_check_branch
      %18 = sbr.rel (0) target = $region5
    $region4: #{tpu_custom_call.1} parent=1 // pred_region
      %20 = vsyncadd [#allocation3], 0
      %s22 = sshll.u32 %s0, 4
      %s23 = int_to_ptr.hbm [resolvable:$true] %s22
      %s24 = sshll.u32 [#allocation2], 4
      %s25 = int_to_ptr.vmem [resolvable:$true] %s24
      %27 = dma.hbm_to_vmem [thread:$0]  %s23, 128, %s25, [#allocation3]
    $region5: #{tpu_custom_call.1} parent=1 // pred_fallthru
      _
    // Predicated region
    $region6: #{tpu_custom_call.1} parent=1 // pred_check
      _
    $region7: #{tpu_custom_call.1} parent=1 // pred_check_branch
      %29 = sbr.rel (0) target = $region9
    $region8: #{tpu_custom_call.1} parent=1 // pred_region
      %31 = vsyncadd [#allocation6], 0
      %s33 = sshll.u32 %s1, 4
      %s34 = int_to_ptr.hbm [resolvable:$true] %s33
      %s35 = sshll.u32 [#allocation5], 4
      %s36 = int_to_ptr.vmem [resolvable:$true] %s35
      %38 = dma.hbm_to_vmem [thread:$0]  %s34, 512, %s36, [#allocation6]
    $region9: #{tpu_custom_call.1} parent=1 // pred_fallthru
      _
    // Predicated region
    $region10: #{tpu_custom_call.1} parent=1 // pred_check
      _
    $region11: #{tpu_custom_call.1} parent=1 // pred_check_branch
      %40 = sbr.rel (0) target = $region13
    $region12: #{tpu_custom_call.1} parent=1 // pred_region
      %42 = vsyncadd [#allocation6], 0
      %s44 = sshll.u32 %s2, 4
      %s45 = int_to_ptr.hbm [resolvable:$true] %s44
      %s46 = sshll.u32 [#allocation7], 4
      %s47 = int_to_ptr.vmem [resolvable:$true] %s46
      %49 = dma.hbm_to_vmem [thread:$0]  %s45, 512, %s47, [#allocation6]
    $region13: #{tpu_custom_call.1} parent=1 // pred_fallthru
      _
    // Predicated region
    $region14: #{tpu_custom_call.1} parent=1 // pred_check
      _
    $region15: #{tpu_custom_call.1} parent=1 // pred_check_branch
      %51 = sbr.rel (0) target = $region17
    $region16: #{tpu_custom_call.1} parent=1 // pred_region
      %53 = vsyncadd [#allocation9], 0
      %s54 = sshll.u32 %s3, 4
      %s55 = int_to_ptr.hbm [resolvable:$true] %s54
      %s56 = sshll.u32 [#allocation8], 4
      %s57 = int_to_ptr.vmem [resolvable:$true] %s56
      %62 = dma.hbm_to_vmem [thread:$0]  %s55, 4096, %s57, [#allocation9], 256, 256, 16
    $region17: #{tpu_custom_call.1} parent=1 // pred_fallthru
      _
    // Predicated region
    $region18: #{tpu_custom_call.1} parent=1 // pred_check
      _
    $region19: #{tpu_custom_call.1} parent=1 // pred_check_branch
      %64 = sbr.rel (0) target = $region21
    $region20: #{tpu_custom_call.1} parent=1 // pred_region
      %66 = vsyncadd [#allocation9], 0
      %s68 = sshll.u32 %s4, 4
      %s69 = int_to_ptr.hbm [resolvable:$true] %s68
      %s70 = sshll.u32 [#allocation10], 4
      %s71 = int_to_ptr.vmem [resolvable:$true] %s70
      %73 = dma.hbm_to_vmem [thread:$0]  %s69, 64, %s71, [#allocation9]
    $region21: #{tpu_custom_call.1} parent=1 // pred_fallthru
      _
    // Predicated region
    $region22: #{tpu_custom_call.1} parent=1 // pred_check
      _
    $region23: #{tpu_custom_call.1} parent=1 // pred_check_branch
      %75 = sbr.rel (0) target = $region25
    $region24: #{tpu_custom_call.1} parent=1 // pred_region
      %77 = vsyncadd [#allocation12], 0
      %s78 = sshll.u32 %s5, 4
      %s79 = int_to_ptr.hbm [resolvable:$true] %s78
      %s80 = sshll.u32 [#allocation11], 4
      %s81 = int_to_ptr.vmem [resolvable:$true] %s80
      %86 = dma.hbm_to_vmem [thread:$0]  %s79, 16384, %s81, [#allocation12], 256, 256, 16
    $region25: #{tpu_custom_call.1} parent=1 // pred_fallthru
      _
    // Predicated region
    $region26: #{tpu_custom_call.1} parent=1 // pred_check
      _
    $region27: #{tpu_custom_call.1} parent=1 // pred_check_branch
      %88 = sbr.rel (0) target = $region29
    $region28: #{tpu_custom_call.1} parent=1 // pred_region
      _
    $region29: #{tpu_custom_call.1} parent=1 // pred_fallthru
      _
    // Predicated region
    $region30: #{tpu_custom_call.1} parent=1 // pred_check
      _
    $region31: #{tpu_custom_call.1} parent=1 // pred_check_branch
      %90 = sbr.rel (0) target = $region33
    $region32: #{tpu_custom_call.1} parent=1 // pred_region
      %92 = dma.done [#allocation3], 128
    $region33: #{tpu_custom_call.1} parent=1 // pred_fallthru
      _
    // Predicated region
    $region34: #{tpu_custom_call.1} parent=1 // pred_check
      _
    $region35: #{tpu_custom_call.1} parent=1 // pred_check_branch
      %94 = sbr.rel (0) target = $region37
    $region36: #{tpu_custom_call.1} parent=1 // pred_region
      %96 = dma.done [#allocation6], 512
    $region37: #{tpu_custom_call.1} parent=1 // pred_fallthru
      _
    // Predicated region
    $region38: #{tpu_custom_call.1} parent=1 // pred_check
      _
    $region39: #{tpu_custom_call.1} parent=1 // pred_check_branch
      %98 = sbr.rel (0) target = $region41
    $region40: #{tpu_custom_call.1} parent=1 // pred_region
      %100 = dma.done [#allocation6], 512
    $region41: #{tpu_custom_call.1} parent=1 // pred_fallthru
      _
    // Predicated region
    $region42: #{tpu_custom_call.1} parent=1 // pred_check
      _
    $region43: #{tpu_custom_call.1} parent=1 // pred_check_branch
      %102 = sbr.rel (0) target = $region45
    $region44: #{tpu_custom_call.1} parent=1 // pred_region
      %104 = dma.done [#allocation9], 4096
    $region45: #{tpu_custom_call.1} parent=1 // pred_fallthru
      _
    // Predicated region
    $region46: #{tpu_custom_call.1} parent=1 // pred_check
      _
    $region47: #{tpu_custom_call.1} parent=1 // pred_check_branch
      %106 = sbr.rel (0) target = $region49
    $region48: #{tpu_custom_call.1} parent=1 // pred_region
      %108 = dma.done [#allocation9], 64
    $region49: #{tpu_custom_call.1} parent=1 // pred_fallthru
      _
    // Predicated region
    $region50: #{tpu_custom_call.1} parent=1 // pred_check
      _
    $region51: #{tpu_custom_call.1} parent=1 // pred_check_branch
      %110 = sbr.rel (0) target = $region53
    $region52: #{tpu_custom_call.1} parent=1 // pred_region
      %112 = dma.done [#allocation12], 16384
    $region53: #{tpu_custom_call.1} parent=1 // pred_fallthru
      _
    %v113 = vld [vmem:[#allocation2] sm:$0xff]
    %v114 = vpack.c.bf16 %v113, %v113
    %v115 = vld [vmem:[#allocation8] sm:$0xff]
    %v116 = vld [vmem:[#allocation8 + $0x8] sm:$0xff]
    %v117 = vld [vmem:[#allocation8 + $0x10] sm:$0xff]
    %v118 = vld [vmem:[#allocation8 + $0x18] sm:$0xff]
    %v119 = vld [vmem:[#allocation8 + $0x20] sm:$0xff]
    %v120 = vld [vmem:[#allocation8 + $0x28] sm:$0xff]
    %v121 = vld [vmem:[#allocation8 + $0x30] sm:$0xff]
    %v122 = vld [vmem:[#allocation8 + $0x38] sm:$0xff]
    %v123 = vld [vmem:[#allocation8 + $0x40] sm:$0xff]
    %v124 = vld [vmem:[#allocation8 + $0x48] sm:$0xff]
    %v125 = vld [vmem:[#allocation8 + $0x50] sm:$0xff]
    %v126 = vld [vmem:[#allocation8 + $0x58] sm:$0xff]
    %v127 = vld [vmem:[#allocation8 + $0x60] sm:$0xff]
    %v128 = vld [vmem:[#allocation8 + $0x68] sm:$0xff]
    %v129 = vld [vmem:[#allocation8 + $0x70] sm:$0xff]
    %v130 = vld [vmem:[#allocation8 + $0x78] sm:$0xff]
    %v131 = vld [vmem:[#allocation8 + $0x80] sm:$0xff]
    %v132 = vld [vmem:[#allocation8 + $0x88] sm:$0xff]
    %v133 = vld [vmem:[#allocation8 + $0x90] sm:$0xff]
    %v134 = vld [vmem:[#allocation8 + $0x98] sm:$0xff]
    %v135 = vld [vmem:[#allocation8 + $0xa0] sm:$0xff]
    %v136 = vld [vmem:[#allocation8 + $0xa8] sm:$0xff]
    %v137 = vld [vmem:[#allocation8 + $0xb0] sm:$0xff]
    %v138 = vld [vmem:[#allocation8 + $0xb8] sm:$0xff]
    %v139 = vld [vmem:[#allocation8 + $0xc0] sm:$0xff]
    %v140 = vld [vmem:[#allocation8 + $0xc8] sm:$0xff]
    %v141 = vld [vmem:[#allocation8 + $0xd0] sm:$0xff]
    %v142 = vld [vmem:[#allocation8 + $0xd8] sm:$0xff]
    %v143 = vld [vmem:[#allocation8 + $0xe0] sm:$0xff]
    %v144 = vld [vmem:[#allocation8 + $0xe8] sm:$0xff]
    %v145 = vld [vmem:[#allocation8 + $0xf0] sm:$0xff]
    %v146 = vld [vmem:[#allocation8 + $0xf8] sm:$0xff]
    %v147 = vld [vmem:[#allocation10] sm:$0xf]
    %v149 = vperm.slane %v147, 0
    %v150 = vperm.slane %v147, 1
    %v151 = vperm.slane %v147, 2
    %v152 = vperm.slane %v147, 3
    %v189 = vunpack.c.l.b16 %v115
    %v190 = vunpack.c.h.b16 %v115
    %v191 = vunpack.c.l.b16 %v116
    %v192 = vunpack.c.h.b16 %v116
    %v193 = vunpack.c.l.b16 %v117
    %v194 = vunpack.c.h.b16 %v117
    %v195 = vunpack.c.l.b16 %v118
    %v196 = vunpack.c.h.b16 %v118
    %v197 = vunpack.c.l.b16 %v119
    %v198 = vunpack.c.h.b16 %v119
    %v199 = vunpack.c.l.b16 %v120
    %v200 = vunpack.c.h.b16 %v120
    %v201 = vunpack.c.l.b16 %v121
    %v202 = vunpack.c.h.b16 %v121
    %v203 = vunpack.c.l.b16 %v122
    %v204 = vunpack.c.h.b16 %v122
    %v205 = vunpack.c.l.b16 %v123
    %v206 = vunpack.c.h.b16 %v123
    %v207 = vunpack.c.l.b16 %v124
    %v208 = vunpack.c.h.b16 %v124
    %v209 = vunpack.c.l.b16 %v125
    %v210 = vunpack.c.h.b16 %v125
    %v211 = vunpack.c.l.b16 %v126
    %v212 = vunpack.c.h.b16 %v126
    %v213 = vunpack.c.l.b16 %v127
    %v214 = vunpack.c.h.b16 %v127
    %v215 = vunpack.c.l.b16 %v128
    %v216 = vunpack.c.h.b16 %v128
    %v217 = vunpack.c.l.b16 %v129
    %v218 = vunpack.c.h.b16 %v129
    %v219 = vunpack.c.l.b16 %v130
    %v220 = vunpack.c.h.b16 %v130
    %v221 = vunpack.c.l.b16 %v131
    %v222 = vunpack.c.h.b16 %v131
    %v223 = vunpack.c.l.b16 %v132
    %v224 = vunpack.c.h.b16 %v132
    %v225 = vunpack.c.l.b16 %v133
    %v226 = vunpack.c.h.b16 %v133
    %v227 = vunpack.c.l.b16 %v134
    %v228 = vunpack.c.h.b16 %v134
    %v229 = vunpack.c.l.b16 %v135
    %v230 = vunpack.c.h.b16 %v135
    %v231 = vunpack.c.l.b16 %v136
    %v232 = vunpack.c.h.b16 %v136
    %v233 = vunpack.c.l.b16 %v137
    %v234 = vunpack.c.h.b16 %v137
    %v235 = vunpack.c.l.b16 %v138
    %v236 = vunpack.c.h.b16 %v138
    %v237 = vunpack.c.l.b16 %v139
    %v238 = vunpack.c.h.b16 %v139
    %v239 = vunpack.c.l.b16 %v140
    %v240 = vunpack.c.h.b16 %v140
    %v241 = vunpack.c.l.b16 %v141
    %v242 = vunpack.c.h.b16 %v141
    %v243 = vunpack.c.l.b16 %v142
    %v244 = vunpack.c.h.b16 %v142
    %v245 = vunpack.c.l.b16 %v143
    %v246 = vunpack.c.h.b16 %v143
    %v247 = vunpack.c.l.b16 %v144
    %v248 = vunpack.c.h.b16 %v144
    %v249 = vunpack.c.l.b16 %v145
    %v250 = vunpack.c.h.b16 %v145
    %v251 = vunpack.c.l.b16 %v146
    %v252 = vunpack.c.h.b16 %v146
    %v253 = vpack.c.b16 %v193, %v189
    %v254 = vpack.c.b16 %v194, %v190
    %v255 = vpack.c.b16 %v195, %v191
    %v256 = vpack.c.b16 %v196, %v192
    %v257 = vpack.c.b16 %v201, %v197
    %v258 = vpack.c.b16 %v202, %v198
    %v259 = vpack.c.b16 %v203, %v199
    %v260 = vpack.c.b16 %v204, %v200
    %v261 = vpack.c.b16 %v209, %v205
    %v262 = vpack.c.b16 %v210, %v206
    %v263 = vpack.c.b16 %v211, %v207
    %v264 = vpack.c.b16 %v212, %v208
    %v265 = vpack.c.b16 %v217, %v213
    %v266 = vpack.c.b16 %v218, %v214
    %v267 = vpack.c.b16 %v219, %v215
    %v268 = vpack.c.b16 %v220, %v216
    %v269 = vpack.c.b16 %v225, %v221
    %v270 = vpack.c.b16 %v226, %v222
    %v271 = vpack.c.b16 %v227, %v223
    %v272 = vpack.c.b16 %v228, %v224
    %v273 = vpack.c.b16 %v233, %v229
    %v274 = vpack.c.b16 %v234, %v230
    %v275 = vpack.c.b16 %v235, %v231
    %v276 = vpack.c.b16 %v236, %v232
    %v277 = vpack.c.b16 %v241, %v237
    %v278 = vpack.c.b16 %v242, %v238
    %v279 = vpack.c.b16 %v243, %v239
    %v280 = vpack.c.b16 %v244, %v240
    %v281 = vpack.c.b16 %v249, %v245
    %v282 = vpack.c.b16 %v250, %v246
    %v283 = vpack.c.b16 %v251, %v247
    %v284 = vpack.c.b16 %v252, %v248
    %317 = vmatpush.bf16.msra.mxu0 %v281
    %318 = vmatpush.bf16.msra.mxu0 %v277
    %319 = vmatpush.bf16.msra.mxu0 %v273
    %320 = vmatpush.bf16.msra.mxu0 %v269
    %321 = vmatpush.bf16.msra.mxu0 %v265
    %322 = vmatpush.bf16.msra.mxu0 %v261
    %323 = vmatpush.bf16.msra.mxu0 %v257
    %324 = vmatpush.bf16.msra.mxu0 %v253
    %325 = vmatmul.bf16.gmra.mxu0 %v114
    %v326 = vpop.f32.mrf.mxu0
    %v327 = vadd.f32 %v149, %v326
    %v328 = vpop.f32.mrf.mxu0
    %329 = vdwg.mxu0
    %330 = vmatpush.bf16.msra.mxu0 %v282
    %331 = vmatpush.bf16.msra.mxu0 %v278
    %332 = vmatpush.bf16.msra.mxu0 %v274
    %333 = vmatpush.bf16.msra.mxu0 %v270
    %334 = vmatpush.bf16.msra.mxu0 %v266
    %335 = vmatpush.bf16.msra.mxu0 %v262
    %336 = vmatpush.bf16.msra.mxu0 %v258
    %337 = vmatpush.bf16.msra.mxu0 %v254
    %338 = vmatmul.bf16.gmra.mxu0 %v114
    %v339 = vpop.f32.mrf.mxu0
    %v340 = vadd.f32 %v150, %v339
    %v341 = vpop.f32.mrf.mxu0
    %342 = vdwg.mxu0
    %343 = vmatpush.bf16.msra.mxu0 %v283
    %344 = vmatpush.bf16.msra.mxu0 %v279
    %345 = vmatpush.bf16.msra.mxu0 %v275
    %346 = vmatpush.bf16.msra.mxu0 %v271
    %347 = vmatpush.bf16.msra.mxu0 %v267
    %348 = vmatpush.bf16.msra.mxu0 %v263
    %349 = vmatpush.bf16.msra.mxu0 %v259
    %350 = vmatpush.bf16.msra.mxu0 %v255
    %351 = vmatmul.bf16.gmra.mxu0 %v114
    %v352 = vpop.f32.mrf.mxu0
    %v353 = vadd.f32 %v151, %v352
    %v354 = vpop.f32.mrf.mxu0
    %355 = vdwg.mxu0
    %356 = vmatpush.bf16.msra.mxu0 %v284
    %357 = vmatpush.bf16.msra.mxu0 %v280
    %358 = vmatpush.bf16.msra.mxu0 %v276
    %359 = vmatpush.bf16.msra.mxu0 %v272
    %360 = vmatpush.bf16.msra.mxu0 %v268
    %361 = vmatpush.bf16.msra.mxu0 %v264
    %362 = vmatpush.bf16.msra.mxu0 %v260
    %363 = vmatpush.bf16.msra.mxu0 %v256
    %364 = vmatmul.bf16.gmra.mxu0 %v114
    %v365 = vpop.f32.mrf.mxu0
    %v366 = vadd.f32 %v152, %v365
    %v367 = vpop.f32.mrf.mxu0
    %368 = vdwg.mxu0
    %v369 = vtanh.pop %v327
    %v370 = vtanh.pop %v340
    %v371 = vtanh.pop %v353
    %v372 = vtanh.pop %v366
    %v373 = vld [vmem:[#allocation5] sm:$0xff]
    %v374 = vld [vmem:[#allocation5 + $0x8] sm:$0xff]
    %v375 = vld [vmem:[#allocation5 + $0x10] sm:$0xff]
    %v376 = vld [vmem:[#allocation5 + $0x18] sm:$0xff]
    %v377 = vpack.c.bf16 %v373, %v373
    %v378 = vpack.c.bf16 %v374, %v374
    %v379 = vpack.c.bf16 %v375, %v375
    %v380 = vpack.c.bf16 %v376, %v376
    %v381 = vld [vmem:[#allocation11] sm:$0xff]
    %v382 = vld [vmem:[#allocation11 + $0x8] sm:$0xff]
    %v383 = vld [vmem:[#allocation11 + $0x10] sm:$0xff]
    %v384 = vld [vmem:[#allocation11 + $0x18] sm:$0xff]
    %v385 = vld [vmem:[#allocation11 + $0x20] sm:$0xff]
    %v386 = vld [vmem:[#allocation11 + $0x28] sm:$0xff]
    %v387 = vld [vmem:[#allocation11 + $0x30] sm:$0xff]
    %v388 = vld [vmem:[#allocation11 + $0x38] sm:$0xff]
    %v389 = vld [vmem:[#allocation11 + $0x40] sm:$0xff]
    %v390 = vld [vmem:[#allocation11 + $0x48] sm:$0xff]
    %v391 = vld [vmem:[#allocation11 + $0x50] sm:$0xff]
    %v392 = vld [vmem:[#allocation11 + $0x58] sm:$0xff]
    %v393 = vld [vmem:[#allocation11 + $0x60] sm:$0xff]
    %v394 = vld [vmem:[#allocation11 + $0x68] sm:$0xff]
    %v395 = vld [vmem:[#allocation11 + $0x70] sm:$0xff]
    %v396 = vld [vmem:[#allocation11 + $0x78] sm:$0xff]
    %v397 = vld [vmem:[#allocation11 + $0x80] sm:$0xff]
    %v398 = vld [vmem:[#allocation11 + $0x88] sm:$0xff]
    %v399 = vld [vmem:[#allocation11 + $0x90] sm:$0xff]
    %v400 = vld [vmem:[#allocation11 + $0x98] sm:$0xff]
    %v401 = vld [vmem:[#allocation11 + $0xa0] sm:$0xff]
    %v402 = vld [vmem:[#allocation11 + $0xa8] sm:$0xff]
    %v403 = vld [vmem:[#allocation11 + $0xb0] sm:$0xff]
    %v404 = vld [vmem:[#allocation11 + $0xb8] sm:$0xff]
    %v405 = vld [vmem:[#allocation11 + $0xc0] sm:$0xff]
    %v406 = vld [vmem:[#allocation11 + $0xc8] sm:$0xff]
    %v407 = vld [vmem:[#allocation11 + $0xd0] sm:$0xff]
    %v408 = vld [vmem:[#allocation11 + $0xd8] sm:$0xff]
    %v409 = vld [vmem:[#allocation11 + $0xe0] sm:$0xff]
    %v410 = vld [vmem:[#allocation11 + $0xe8] sm:$0xff]
    %v411 = vld [vmem:[#allocation11 + $0xf0] sm:$0xff]
    %v412 = vld [vmem:[#allocation11 + $0xf8] sm:$0xff]
    %v413 = vld [vmem:[#allocation11 + $0x100] sm:$0xff]
    %v414 = vld [vmem:[#allocation11 + $0x108] sm:$0xff]
    %v415 = vld [vmem:[#allocation11 + $0x110] sm:$0xff]
    %v416 = vld [vmem:[#allocation11 + $0x118] sm:$0xff]
    %v417 = vld [vmem:[#allocation11 + $0x120] sm:$0xff]
    %v418 = vld [vmem:[#allocation11 + $0x128] sm:$0xff]
    %v419 = vld [vmem:[#allocation11 + $0x130] sm:$0xff]
    %v420 = vld [vmem:[#allocation11 + $0x138] sm:$0xff]
    %v421 = vld [vmem:[#allocation11 + $0x140] sm:$0xff]
    %v422 = vld [vmem:[#allocation11 + $0x148] sm:$0xff]
    %v423 = vld [vmem:[#allocation11 + $0x150] sm:$0xff]
    %v424 = vld [vmem:[#allocation11 + $0x158] sm:$0xff]
    %v425 = vld [vmem:[#allocation11 + $0x160] sm:$0xff]
    %v426 = vld [vmem:[#allocation11 + $0x168] sm:$0xff]
    %v427 = vld [vmem:[#allocation11 + $0x170] sm:$0xff]
    %v428 = vld [vmem:[#allocation11 + $0x178] sm:$0xff]
    %v429 = vld [vmem:[#allocation11 + $0x180] sm:$0xff]
    %v430 = vld [vmem:[#allocation11 + $0x188] sm:$0xff]
    %v431 = vld [vmem:[#allocation11 + $0x190] sm:$0xff]
    %v432 = vld [vmem:[#allocation11 + $0x198] sm:$0xff]
    %v433 = vld [vmem:[#allocation11 + $0x1a0] sm:$0xff]
    %v434 = vld [vmem:[#allocation11 + $0x1a8] sm:$0xff]
    %v435 = vld [vmem:[#allocation11 + $0x1b0] sm:$0xff]
    %v436 = vld [vmem:[#allocation11 + $0x1b8] sm:$0xff]
    %v437 = vld [vmem:[#allocation11 + $0x1c0] sm:$0xff]
    %v438 = vld [vmem:[#allocation11 + $0x1c8] sm:$0xff]
    %v439 = vld [vmem:[#allocation11 + $0x1d0] sm:$0xff]
    %v440 = vld [vmem:[#allocation11 + $0x1d8] sm:$0xff]
    %v441 = vld [vmem:[#allocation11 + $0x1e0] sm:$0xff]
    %v442 = vld [vmem:[#allocation11 + $0x1e8] sm:$0xff]
    %v443 = vld [vmem:[#allocation11 + $0x1f0] sm:$0xff]
    %v444 = vld [vmem:[#allocation11 + $0x1f8] sm:$0xff]
    %v445 = vld [vmem:[#allocation11 + $0x200] sm:$0xff]
    %v446 = vld [vmem:[#allocation11 + $0x208] sm:$0xff]
    %v447 = vld [vmem:[#allocation11 + $0x210] sm:$0xff]
    %v448 = vld [vmem:[#allocation11 + $0x218] sm:$0xff]
    %v449 = vld [vmem:[#allocation11 + $0x220] sm:$0xff]
    %v450 = vld [vmem:[#allocation11 + $0x228] sm:$0xff]
    %v451 = vld [vmem:[#allocation11 + $0x230] sm:$0xff]
    %v452 = vld [vmem:[#allocation11 + $0x238] sm:$0xff]
    %v453 = vld [vmem:[#allocation11 + $0x240] sm:$0xff]
    %v454 = vld [vmem:[#allocation11 + $0x248] sm:$0xff]
    %v455 = vld [vmem:[#allocation11 + $0x250] sm:$0xff]
    %v456 = vld [vmem:[#allocation11 + $0x258] sm:$0xff]
    %v457 = vld [vmem:[#allocation11 + $0x260] sm:$0xff]
    %v458 = vld [vmem:[#allocation11 + $0x268] sm:$0xff]
    %v459 = vld [vmem:[#allocation11 + $0x270] sm:$0xff]
    %v460 = vld [vmem:[#allocation11 + $0x278] sm:$0xff]
    %v461 = vld [vmem:[#allocation11 + $0x280] sm:$0xff]
    %v462 = vld [vmem:[#allocation11 + $0x288] sm:$0xff]
    %v463 = vld [vmem:[#allocation11 + $0x290] sm:$0xff]
    %v464 = vld [vmem:[#allocation11 + $0x298] sm:$0xff]
    %v465 = vld [vmem:[#allocation11 + $0x2a0] sm:$0xff]
    %v466 = vld [vmem:[#allocation11 + $0x2a8] sm:$0xff]
    %v467 = vld [vmem:[#allocation11 + $0x2b0] sm:$0xff]
    %v468 = vld [vmem:[#allocation11 + $0x2b8] sm:$0xff]
    %v469 = vld [vmem:[#allocation11 + $0x2c0] sm:$0xff]
    %v470 = vld [vmem:[#allocation11 + $0x2c8] sm:$0xff]
    %v471 = vld [vmem:[#allocation11 + $0x2d0] sm:$0xff]
    %v472 = vld [vmem:[#allocation11 + $0x2d8] sm:$0xff]
    %v473 = vld [vmem:[#allocation11 + $0x2e0] sm:$0xff]
    %v474 = vld [vmem:[#allocation11 + $0x2e8] sm:$0xff]
    %v475 = vld [vmem:[#allocation11 + $0x2f0] sm:$0xff]
    %v476 = vld [vmem:[#allocation11 + $0x2f8] sm:$0xff]
    %v477 = vld [vmem:[#allocation11 + $0x300] sm:$0xff]
    %v478 = vld [vmem:[#allocation11 + $0x308] sm:$0xff]
    %v479 = vld [vmem:[#allocation11 + $0x310] sm:$0xff]
    %v480 = vld [vmem:[#allocation11 + $0x318] sm:$0xff]
    %v481 = vld [vmem:[#allocation11 + $0x320] sm:$0xff]
    %v482 = vld [vmem:[#allocation11 + $0x328] sm:$0xff]
    %v483 = vld [vmem:[#allocation11 + $0x330] sm:$0xff]
    %v484 = vld [vmem:[#allocation11 + $0x338] sm:$0xff]
    %v485 = vld [vmem:[#allocation11 + $0x340] sm:$0xff]
    %v486 = vld [vmem:[#allocation11 + $0x348] sm:$0xff]
    %v487 = vld [vmem:[#allocation11 + $0x350] sm:$0xff]
    %v488 = vld [vmem:[#allocation11 + $0x358] sm:$0xff]
    %v489 = vld [vmem:[#allocation11 + $0x360] sm:$0xff]
    %v490 = vld [vmem:[#allocation11 + $0x368] sm:$0xff]
    %v491 = vld [vmem:[#allocation11 + $0x370] sm:$0xff]
    %v492 = vld [vmem:[#allocation11 + $0x378] sm:$0xff]
    %v493 = vld [vmem:[#allocation11 + $0x380] sm:$0xff]
    %v494 = vld [vmem:[#allocation11 + $0x388] sm:$0xff]
    %v495 = vld [vmem:[#allocation11 + $0x390] sm:$0xff]
    %v496 = vld [vmem:[#allocation11 + $0x398] sm:$0xff]
    %v497 = vld [vmem:[#allocation11 + $0x3a0] sm:$0xff]
    %v498 = vld [vmem:[#allocation11 + $0x3a8] sm:$0xff]
    %v499 = vld [vmem:[#allocation11 + $0x3b0] sm:$0xff]
    %v500 = vld [vmem:[#allocation11 + $0x3b8] sm:$0xff]
    %v501 = vld [vmem:[#allocation11 + $0x3c0] sm:$0xff]
    %v502 = vld [vmem:[#allocation11 + $0x3c8] sm:$0xff]
    %v503 = vld [vmem:[#allocation11 + $0x3d0] sm:$0xff]
    %v504 = vld [vmem:[#allocation11 + $0x3d8] sm:$0xff]
    %v505 = vld [vmem:[#allocation11 + $0x3e0] sm:$0xff]
    %v506 = vld [vmem:[#allocation11 + $0x3e8] sm:$0xff]
    %v507 = vld [vmem:[#allocation11 + $0x3f0] sm:$0xff]
    %v508 = vld [vmem:[#allocation11 + $0x3f8] sm:$0xff]
    %v509 = vld [vmem:[%s6] sm:$0xf]
    %v511 = vperm.slane %v509, 0
    %v512 = vperm.slane %v509, 1
    %v513 = vperm.slane %v509, 2
    %v514 = vperm.slane %v509, 3
    %v647 = vunpack.c.l.b16 %v381
    %v648 = vunpack.c.h.b16 %v381
    %v649 = vunpack.c.l.b16 %v382
    %v650 = vunpack.c.h.b16 %v382
    %v651 = vunpack.c.l.b16 %v383
    %v652 = vunpack.c.h.b16 %v383
    %v653 = vunpack.c.l.b16 %v384
    %v654 = vunpack.c.h.b16 %v384
    %v655 = vunpack.c.l.b16 %v385
    %v656 = vunpack.c.h.b16 %v385
    %v657 = vunpack.c.l.b16 %v386
    %v658 = vunpack.c.h.b16 %v386
    %v659 = vunpack.c.l.b16 %v387
    %v660 = vunpack.c.h.b16 %v387
    %v661 = vunpack.c.l.b16 %v388
    %v662 = vunpack.c.h.b16 %v388
    %v663 = vunpack.c.l.b16 %v389
    %v664 = vunpack.c.h.b16 %v389
    %v665 = vunpack.c.l.b16 %v390
    %v666 = vunpack.c.h.b16 %v390
    %v667 = vunpack.c.l.b16 %v391
    %v668 = vunpack.c.h.b16 %v391
    %v669 = vunpack.c.l.b16 %v392
    %v670 = vunpack.c.h.b16 %v392
    %v671 = vunpack.c.l.b16 %v393
    %v672 = vunpack.c.h.b16 %v393
    %v673 = vunpack.c.l.b16 %v394
    %v674 = vunpack.c.h.b16 %v394
    %v675 = vunpack.c.l.b16 %v395
    %v676 = vunpack.c.h.b16 %v395
    %v677 = vunpack.c.l.b16 %v396
    %v678 = vunpack.c.h.b16 %v396
    %v679 = vunpack.c.l.b16 %v397
    %v680 = vunpack.c.h.b16 %v397
    %v681 = vunpack.c.l.b16 %v398
    %v682 = vunpack.c.h.b16 %v398
    %v683 = vunpack.c.l.b16 %v399
    %v684 = vunpack.c.h.b16 %v399
    %v685 = vunpack.c.l.b16 %v400
    %v686 = vunpack.c.h.b16 %v400
    %v687 = vunpack.c.l.b16 %v401
    %v688 = vunpack.c.h.b16 %v401
    %v689 = vunpack.c.l.b16 %v402
    %v690 = vunpack.c.h.b16 %v402
    %v691 = vunpack.c.l.b16 %v403
    %v692 = vunpack.c.h.b16 %v403
    %v693 = vunpack.c.l.b16 %v404
    %v694 = vunpack.c.h.b16 %v404
    %v695 = vunpack.c.l.b16 %v405
    %v696 = vunpack.c.h.b16 %v405
    %v697 = vunpack.c.l.b16 %v406
    %v698 = vunpack.c.h.b16 %v406
    %v699 = vunpack.c.l.b16 %v407
    %v700 = vunpack.c.h.b16 %v407
    %v701 = vunpack.c.l.b16 %v408
    %v702 = vunpack.c.h.b16 %v408
    %v703 = vunpack.c.l.b16 %v409
    %v704 = vunpack.c.h.b16 %v409
    %v705 = vunpack.c.l.b16 %v410
    %v706 = vunpack.c.h.b16 %v410
    %v707 = vunpack.c.l.b16 %v411
    %v708 = vunpack.c.h.b16 %v411
    %v709 = vunpack.c.l.b16 %v412
    %v710 = vunpack.c.h.b16 %v412
    %v711 = vunpack.c.l.b16 %v413
    %v712 = vunpack.c.h.b16 %v413
    %v713 = vunpack.c.l.b16 %v414
    %v714 = vunpack.c.h.b16 %v414
    %v715 = vunpack.c.l.b16 %v415
    %v716 = vunpack.c.h.b16 %v415
    %v717 = vunpack.c.l.b16 %v416
    %v718 = vunpack.c.h.b16 %v416
    %v719 = vunpack.c.l.b16 %v417
    %v720 = vunpack.c.h.b16 %v417
    %v721 = vunpack.c.l.b16 %v418
    %v722 = vunpack.c.h.b16 %v418
    %v723 = vunpack.c.l.b16 %v419
    %v724 = vunpack.c.h.b16 %v419
    %v725 = vunpack.c.l.b16 %v420
    %v726 = vunpack.c.h.b16 %v420
    %v727 = vunpack.c.l.b16 %v421
    %v728 = vunpack.c.h.b16 %v421
    %v729 = vunpack.c.l.b16 %v422
    %v730 = vunpack.c.h.b16 %v422
    %v731 = vunpack.c.l.b16 %v423
    %v732 = vunpack.c.h.b16 %v423
    %v733 = vunpack.c.l.b16 %v424
    %v734 = vunpack.c.h.b16 %v424
    %v735 = vunpack.c.l.b16 %v425
    %v736 = vunpack.c.h.b16 %v425
    %v737 = vunpack.c.l.b16 %v426
    %v738 = vunpack.c.h.b16 %v426
    %v739 = vunpack.c.l.b16 %v427
    %v740 = vunpack.c.h.b16 %v427
    %v741 = vunpack.c.l.b16 %v428
    %v742 = vunpack.c.h.b16 %v428
    %v743 = vunpack.c.l.b16 %v429
    %v744 = vunpack.c.h.b16 %v429
    %v745 = vunpack.c.l.b16 %v430
    %v746 = vunpack.c.h.b16 %v430
    %v747 = vunpack.c.l.b16 %v431
    %v748 = vunpack.c.h.b16 %v431
    %v749 = vunpack.c.l.b16 %v432
    %v750 = vunpack.c.h.b16 %v432
    %v751 = vunpack.c.l.b16 %v433
    %v752 = vunpack.c.h.b16 %v433
    %v753 = vunpack.c.l.b16 %v434
    %v754 = vunpack.c.h.b16 %v434
    %v755 = vunpack.c.l.b16 %v435
    %v756 = vunpack.c.h.b16 %v435
    %v757 = vunpack.c.l.b16 %v436
    %v758 = vunpack.c.h.b16 %v436
    %v759 = vunpack.c.l.b16 %v437
    %v760 = vunpack.c.h.b16 %v437
    %v761 = vunpack.c.l.b16 %v438
    %v762 = vunpack.c.h.b16 %v438
    %v763 = vunpack.c.l.b16 %v439
    %v764 = vunpack.c.h.b16 %v439
    %v765 = vunpack.c.l.b16 %v440
    %v766 = vunpack.c.h.b16 %v440
    %v767 = vunpack.c.l.b16 %v441
    %v768 = vunpack.c.h.b16 %v441
    %v769 = vunpack.c.l.b16 %v442
    %v770 = vunpack.c.h.b16 %v442
    %v771 = vunpack.c.l.b16 %v443
    %v772 = vunpack.c.h.b16 %v443
    %v773 = vunpack.c.l.b16 %v444
    %v774 = vunpack.c.h.b16 %v444
    %v775 = vunpack.c.l.b16 %v445
    %v776 = vunpack.c.h.b16 %v445
    %v777 = vunpack.c.l.b16 %v446
    %v778 = vunpack.c.h.b16 %v446
    %v779 = vunpack.c.l.b16 %v447
    %v780 = vunpack.c.h.b16 %v447
    %v781 = vunpack.c.l.b16 %v448
    %v782 = vunpack.c.h.b16 %v448
    %v783 = vunpack.c.l.b16 %v449
    %v784 = vunpack.c.h.b16 %v449
    %v785 = vunpack.c.l.b16 %v450
    %v786 = vunpack.c.h.b16 %v450
    %v787 = vunpack.c.l.b16 %v451
    %v788 = vunpack.c.h.b16 %v451
    %v789 = vunpack.c.l.b16 %v452
    %v790 = vunpack.c.h.b16 %v452
    %v791 = vunpack.c.l.b16 %v453
    %v792 = vunpack.c.h.b16 %v453
    %v793 = vunpack.c.l.b16 %v454
    %v794 = vunpack.c.h.b16 %v454
    %v795 = vunpack.c.l.b16 %v455
    %v796 = vunpack.c.h.b16 %v455
    %v797 = vunpack.c.l.b16 %v456
    %v798 = vunpack.c.h.b16 %v456
    %v799 = vunpack.c.l.b16 %v457
    %v800 = vunpack.c.h.b16 %v457
    %v801 = vunpack.c.l.b16 %v458
    %v802 = vunpack.c.h.b16 %v458
    %v803 = vunpack.c.l.b16 %v459
    %v804 = vunpack.c.h.b16 %v459
    %v805 = vunpack.c.l.b16 %v460
    %v806 = vunpack.c.h.b16 %v460
    %v807 = vunpack.c.l.b16 %v461
    %v808 = vunpack.c.h.b16 %v461
    %v809 = vunpack.c.l.b16 %v462
    %v810 = vunpack.c.h.b16 %v462
    %v811 = vunpack.c.l.b16 %v463
    %v812 = vunpack.c.h.b16 %v463
    %v813 = vunpack.c.l.b16 %v464
    %v814 = vunpack.c.h.b16 %v464
    %v815 = vunpack.c.l.b16 %v465
    %v816 = vunpack.c.h.b16 %v465
    %v817 = vunpack.c.l.b16 %v466
    %v818 = vunpack.c.h.b16 %v466
    %v819 = vunpack.c.l.b16 %v467
    %v820 = vunpack.c.h.b16 %v467
    %v821 = vunpack.c.l.b16 %v468
    %v822 = vunpack.c.h.b16 %v468
    %v823 = vunpack.c.l.b16 %v469
    %v824 = vunpack.c.h.b16 %v469
    %v825 = vunpack.c.l.b16 %v470
    %v826 = vunpack.c.h.b16 %v470
    %v827 = vunpack.c.l.b16 %v471
    %v828 = vunpack.c.h.b16 %v471
    %v829 = vunpack.c.l.b16 %v472
    %v830 = vunpack.c.h.b16 %v472
    %v831 = vunpack.c.l.b16 %v473
    %v832 = vunpack.c.h.b16 %v473
    %v833 = vunpack.c.l.b16 %v474
    %v834 = vunpack.c.h.b16 %v474
    %v835 = vunpack.c.l.b16 %v475
    %v836 = vunpack.c.h.b16 %v475
    %v837 = vunpack.c.l.b16 %v476
    %v838 = vunpack.c.h.b16 %v476
    %v839 = vunpack.c.l.b16 %v477
    %v840 = vunpack.c.h.b16 %v477
    %v841 = vunpack.c.l.b16 %v478
    %v842 = vunpack.c.h.b16 %v478
    %v843 = vunpack.c.l.b16 %v479
    %v844 = vunpack.c.h.b16 %v479
    %v845 = vunpack.c.l.b16 %v480
    %v846 = vunpack.c.h.b16 %v480
    %v847 = vunpack.c.l.b16 %v481
    %v848 = vunpack.c.h.b16 %v481
    %v849 = vunpack.c.l.b16 %v482
    %v850 = vunpack.c.h.b16 %v482
    %v851 = vunpack.c.l.b16 %v483
    %v852 = vunpack.c.h.b16 %v483
    %v853 = vunpack.c.l.b16 %v484
    %v854 = vunpack.c.h.b16 %v484
    %v855 = vunpack.c.l.b16 %v485
    %v856 = vunpack.c.h.b16 %v485
    %v857 = vunpack.c.l.b16 %v486
    %v858 = vunpack.c.h.b16 %v486
    %v859 = vunpack.c.l.b16 %v487
    %v860 = vunpack.c.h.b16 %v487
    %v861 = vunpack.c.l.b16 %v488
    %v862 = vunpack.c.h.b16 %v488
    %v863 = vunpack.c.l.b16 %v489
    %v864 = vunpack.c.h.b16 %v489
    %v865 = vunpack.c.l.b16 %v490
    %v866 = vunpack.c.h.b16 %v490
    %v867 = vunpack.c.l.b16 %v491
    %v868 = vunpack.c.h.b16 %v491
    %v869 = vunpack.c.l.b16 %v492
    %v870 = vunpack.c.h.b16 %v492
    %v871 = vunpack.c.l.b16 %v493
    %v872 = vunpack.c.h.b16 %v493
    %v873 = vunpack.c.l.b16 %v494
    %v874 = vunpack.c.h.b16 %v494
    %v875 = vunpack.c.l.b16 %v495
    %v876 = vunpack.c.h.b16 %v495
    %v877 = vunpack.c.l.b16 %v496
    %v878 = vunpack.c.h.b16 %v496
    %v879 = vunpack.c.l.b16 %v497
    %v880 = vunpack.c.h.b16 %v497
    %v881 = vunpack.c.l.b16 %v498
    %v882 = vunpack.c.h.b16 %v498
    %v883 = vunpack.c.l.b16 %v499
    %v884 = vunpack.c.h.b16 %v499
    %v885 = vunpack.c.l.b16 %v500
    %v886 = vunpack.c.h.b16 %v500
    %v887 = vunpack.c.l.b16 %v501
    %v888 = vunpack.c.h.b16 %v501
    %v889 = vunpack.c.l.b16 %v502
    %v890 = vunpack.c.h.b16 %v502
    %v891 = vunpack.c.l.b16 %v503
    %v892 = vunpack.c.h.b16 %v503
    %v893 = vunpack.c.l.b16 %v504
    %v894 = vunpack.c.h.b16 %v504
    %v895 = vunpack.c.l.b16 %v505
    %v896 = vunpack.c.h.b16 %v505
    %v897 = vunpack.c.l.b16 %v506
    %v898 = vunpack.c.h.b16 %v506
    %v899 = vunpack.c.l.b16 %v507
    %v900 = vunpack.c.h.b16 %v507
    %v901 = vunpack.c.l.b16 %v508
    %v902 = vunpack.c.h.b16 %v508
    %v903 = vpack.c.b16 %v651, %v647
    %v904 = vpack.c.b16 %v652, %v648
    %v905 = vpack.c.b16 %v653, %v649
    %v906 = vpack.c.b16 %v654, %v650
    %v907 = vpack.c.b16 %v659, %v655
    %v908 = vpack.c.b16 %v660, %v656
    %v909 = vpack.c.b16 %v661, %v657
    %v910 = vpack.c.b16 %v662, %v658
    %v911 = vpack.c.b16 %v667, %v663
    %v912 = vpack.c.b16 %v668, %v664
    %v913 = vpack.c.b16 %v669, %v665
    %v914 = vpack.c.b16 %v670, %v666
    %v915 = vpack.c.b16 %v675, %v671
    %v916 = vpack.c.b16 %v676, %v672
    %v917 = vpack.c.b16 %v677, %v673
    %v918 = vpack.c.b16 %v678, %v674
    %v919 = vpack.c.b16 %v683, %v679
    %v920 = vpack.c.b16 %v684, %v680
    %v921 = vpack.c.b16 %v685, %v681
    %v922 = vpack.c.b16 %v686, %v682
    %v923 = vpack.c.b16 %v691, %v687
    %v924 = vpack.c.b16 %v692, %v688
    %v925 = vpack.c.b16 %v693, %v689
    %v926 = vpack.c.b16 %v694, %v690
    %v927 = vpack.c.b16 %v699, %v695
    %v928 = vpack.c.b16 %v700, %v696
    %v929 = vpack.c.b16 %v701, %v697
    %v930 = vpack.c.b16 %v702, %v698
    %v931 = vpack.c.b16 %v707, %v703
    %v932 = vpack.c.b16 %v708, %v704
    %v933 = vpack.c.b16 %v709, %v705
    %v934 = vpack.c.b16 %v710, %v706
    %v935 = vpack.c.b16 %v715, %v711
    %v936 = vpack.c.b16 %v716, %v712
    %v937 = vpack.c.b16 %v717, %v713
    %v938 = vpack.c.b16 %v718, %v714
    %v939 = vpack.c.b16 %v723, %v719
    %v940 = vpack.c.b16 %v724, %v720
    %v941 = vpack.c.b16 %v725, %v721
    %v942 = vpack.c.b16 %v726, %v722
    %v943 = vpack.c.b16 %v731, %v727
    %v944 = vpack.c.b16 %v732, %v728
    %v945 = vpack.c.b16 %v733, %v729
    %v946 = vpack.c.b16 %v734, %v730
    %v947 = vpack.c.b16 %v739, %v735
    %v948 = vpack.c.b16 %v740, %v736
    %v949 = vpack.c.b16 %v741, %v737
    %v950 = vpack.c.b16 %v742, %v738
    %v951 = vpack.c.b16 %v747, %v743
    %v952 = vpack.c.b16 %v748, %v744
    %v953 = vpack.c.b16 %v749, %v745
    %v954 = vpack.c.b16 %v750, %v746
    %v955 = vpack.c.b16 %v755, %v751
    %v956 = vpack.c.b16 %v756, %v752
    %v957 = vpack.c.b16 %v757, %v753
    %v958 = vpack.c.b16 %v758, %v754
    %v959 = vpack.c.b16 %v763, %v759
    %v960 = vpack.c.b16 %v764, %v760
    %v961 = vpack.c.b16 %v765, %v761
    %v962 = vpack.c.b16 %v766, %v762
    %v963 = vpack.c.b16 %v771, %v767
    %v964 = vpack.c.b16 %v772, %v768
    %v965 = vpack.c.b16 %v773, %v769
    %v966 = vpack.c.b16 %v774, %v770
    %v967 = vpack.c.b16 %v779, %v775
    %v968 = vpack.c.b16 %v780, %v776
    %v969 = vpack.c.b16 %v781, %v777
    %v970 = vpack.c.b16 %v782, %v778
    %v971 = vpack.c.b16 %v787, %v783
    %v972 = vpack.c.b16 %v788, %v784
    %v973 = vpack.c.b16 %v789, %v785
    %v974 = vpack.c.b16 %v790, %v786
    %v975 = vpack.c.b16 %v795, %v791
    %v976 = vpack.c.b16 %v796, %v792
    %v977 = vpack.c.b16 %v797, %v793
    %v978 = vpack.c.b16 %v798, %v794
    %v979 = vpack.c.b16 %v803, %v799
    %v980 = vpack.c.b16 %v804, %v800
    %v981 = vpack.c.b16 %v805, %v801
    %v982 = vpack.c.b16 %v806, %v802
    %v983 = vpack.c.b16 %v811, %v807
    %v984 = vpack.c.b16 %v812, %v808
    %v985 = vpack.c.b16 %v813, %v809
    %v986 = vpack.c.b16 %v814, %v810
    %v987 = vpack.c.b16 %v819, %v815
    %v988 = vpack.c.b16 %v820, %v816
    %v989 = vpack.c.b16 %v821, %v817
    %v990 = vpack.c.b16 %v822, %v818
    %v991 = vpack.c.b16 %v827, %v823
    %v992 = vpack.c.b16 %v828, %v824
    %v993 = vpack.c.b16 %v829, %v825
    %v994 = vpack.c.b16 %v830, %v826
    %v995 = vpack.c.b16 %v835, %v831
    %v996 = vpack.c.b16 %v836, %v832
    %v997 = vpack.c.b16 %v837, %v833
    %v998 = vpack.c.b16 %v838, %v834
    %v999 = vpack.c.b16 %v843, %v839
    %v1000 = vpack.c.b16 %v844, %v840
    %v1001 = vpack.c.b16 %v845, %v841
    %v1002 = vpack.c.b16 %v846, %v842
    %v1003 = vpack.c.b16 %v851, %v847
    %v1004 = vpack.c.b16 %v852, %v848
    %v1005 = vpack.c.b16 %v853, %v849
    %v1006 = vpack.c.b16 %v854, %v850
    %v1007 = vpack.c.b16 %v859, %v855
    %v1008 = vpack.c.b16 %v860, %v856
    %v1009 = vpack.c.b16 %v861, %v857
    %v1010 = vpack.c.b16 %v862, %v858
    %v1011 = vpack.c.b16 %v867, %v863
    %v1012 = vpack.c.b16 %v868, %v864
    %v1013 = vpack.c.b16 %v869, %v865
    %v1014 = vpack.c.b16 %v870, %v866
    %v1015 = vpack.c.b16 %v875, %v871
    %v1016 = vpack.c.b16 %v876, %v872
    %v1017 = vpack.c.b16 %v877, %v873
    %v1018 = vpack.c.b16 %v878, %v874
    %v1019 = vpack.c.b16 %v883, %v879
    %v1020 = vpack.c.b16 %v884, %v880
    %v1021 = vpack.c.b16 %v885, %v881
    %v1022 = vpack.c.b16 %v886, %v882
    %v1023 = vpack.c.b16 %v891, %v887
    %v1024 = vpack.c.b16 %v892, %v888
    %v1025 = vpack.c.b16 %v893, %v889
    %v1026 = vpack.c.b16 %v894, %v890
    %v1027 = vpack.c.b16 %v899, %v895
    %v1028 = vpack.c.b16 %v900, %v896
    %v1029 = vpack.c.b16 %v901, %v897
    %v1030 = vpack.c.b16 %v902, %v898
    %1159 = vmatpush.bf16.msra.mxu0 %v931
    %1160 = vmatpush.bf16.msra.mxu0 %v927
    %1161 = vmatpush.bf16.msra.mxu0 %v923
    %1162 = vmatpush.bf16.msra.mxu0 %v919
    %1163 = vmatpush.bf16.msra.mxu0 %v915
    %1164 = vmatpush.bf16.msra.mxu0 %v911
    %1165 = vmatpush.bf16.msra.mxu0 %v907
    %1166 = vmatpush.bf16.msra.mxu0 %v903
    %1167 = vmatmul.bf16.gmra.mxu0 %v377
    %v1168 = vpop.f32.mrf.mxu0
    %v1169 = vadd.f32 %v511, %v1168
    %v1170 = vpop.f32.mrf.mxu0
    %1171 = vdwg.mxu0
    %1172 = vmatpush.bf16.msra.mxu0 %v963
    %1173 = vmatpush.bf16.msra.mxu0 %v959
    %1174 = vmatpush.bf16.msra.mxu0 %v955
    %1175 = vmatpush.bf16.msra.mxu0 %v951
    %1176 = vmatpush.bf16.msra.mxu0 %v947
    %1177 = vmatpush.bf16.msra.mxu0 %v943
    %1178 = vmatpush.bf16.msra.mxu0 %v939
    %1179 = vmatpush.bf16.msra.mxu0 %v935
    %1180 = vmatmul.bf16.gmra.mxu0 %v378
    %v1181 = vpop.f32.mrf.mxu0
    %v1182 = vadd.f32 %v1169, %v1181
    %v1183 = vpop.f32.mrf.mxu0
    %1184 = vdwg.mxu0
    %1185 = vmatpush.bf16.msra.mxu0 %v995
    %1186 = vmatpush.bf16.msra.mxu0 %v991
    %1187 = vmatpush.bf16.msra.mxu0 %v987
    %1188 = vmatpush.bf16.msra.mxu0 %v983
    %1189 = vmatpush.bf16.msra.mxu0 %v979
    %1190 = vmatpush.bf16.msra.mxu0 %v975
    %1191 = vmatpush.bf16.msra.mxu0 %v971
    %1192 = vmatpush.bf16.msra.mxu0 %v967
    %1193 = vmatmul.bf16.gmra.mxu0 %v379
    %v1194 = vpop.f32.mrf.mxu0
    %v1195 = vadd.f32 %v1182, %v1194
    %v1196 = vpop.f32.mrf.mxu0
    %1197 = vdwg.mxu0
    %1198 = vmatpush.bf16.msra.mxu0 %v1027
    %1199 = vmatpush.bf16.msra.mxu0 %v1023
    %1200 = vmatpush.bf16.msra.mxu0 %v1019
    %1201 = vmatpush.bf16.msra.mxu0 %v1015
    %1202 = vmatpush.bf16.msra.mxu0 %v1011
    %1203 = vmatpush.bf16.msra.mxu0 %v1007
    %1204 = vmatpush.bf16.msra.mxu0 %v1003
    %1205 = vmatpush.bf16.msra.mxu0 %v999
    %1206 = vmatmul.bf16.gmra.mxu0 %v380
    %v1207 = vpop.f32.mrf.mxu0
    %v1208 = vadd.f32 %v1195, %v1207
    %v1209 = vpop.f32.mrf.mxu0
    %1210 = vdwg.mxu0
    %1211 = vmatpush.bf16.msra.mxu0 %v932
    %1212 = vmatpush.bf16.msra.mxu0 %v928
    %1213 = vmatpush.bf16.msra.mxu0 %v924
    %1214 = vmatpush.bf16.msra.mxu0 %v920
    %1215 = vmatpush.bf16.msra.mxu0 %v916
    %1216 = vmatpush.bf16.msra.mxu0 %v912
    %1217 = vmatpush.bf16.msra.mxu0 %v908
    %1218 = vmatpush.bf16.msra.mxu0 %v904
    %1219 = vmatmul.bf16.gmra.mxu0 %v377
    %v1220 = vpop.f32.mrf.mxu0
    %v1221 = vadd.f32 %v512, %v1220
    %v1222 = vpop.f32.mrf.mxu0
    %1223 = vdwg.mxu0
    %1224 = vmatpush.bf16.msra.mxu0 %v964
    %1225 = vmatpush.bf16.msra.mxu0 %v960
    %1226 = vmatpush.bf16.msra.mxu0 %v956
    %1227 = vmatpush.bf16.msra.mxu0 %v952
    %1228 = vmatpush.bf16.msra.mxu0 %v948
    %1229 = vmatpush.bf16.msra.mxu0 %v944
    %1230 = vmatpush.bf16.msra.mxu0 %v940
    %1231 = vmatpush.bf16.msra.mxu0 %v936
    %1232 = vmatmul.bf16.gmra.mxu0 %v378
    %v1233 = vpop.f32.mrf.mxu0
    %v1234 = vadd.f32 %v1221, %v1233
    %v1235 = vpop.f32.mrf.mxu0
    %1236 = vdwg.mxu0
    %1237 = vmatpush.bf16.msra.mxu0 %v996
    %1238 = vmatpush.bf16.msra.mxu0 %v992
    %1239 = vmatpush.bf16.msra.mxu0 %v988
    %1240 = vmatpush.bf16.msra.mxu0 %v984
    %1241 = vmatpush.bf16.msra.mxu0 %v980
    %1242 = vmatpush.bf16.msra.mxu0 %v976
    %1243 = vmatpush.bf16.msra.mxu0 %v972
    %1244 = vmatpush.bf16.msra.mxu0 %v968
    %1245 = vmatmul.bf16.gmra.mxu0 %v379
    %v1246 = vpop.f32.mrf.mxu0
    %v1247 = vadd.f32 %v1234, %v1246
    %v1248 = vpop.f32.mrf.mxu0
    %1249 = vdwg.mxu0
    %1250 = vmatpush.bf16.msra.mxu0 %v1028
    %1251 = vmatpush.bf16.msra.mxu0 %v1024
    %1252 = vmatpush.bf16.msra.mxu0 %v1020
    %1253 = vmatpush.bf16.msra.mxu0 %v1016
    %1254 = vmatpush.bf16.msra.mxu0 %v1012
    %1255 = vmatpush.bf16.msra.mxu0 %v1008
    %1256 = vmatpush.bf16.msra.mxu0 %v1004
    %1257 = vmatpush.bf16.msra.mxu0 %v1000
    %1258 = vmatmul.bf16.gmra.mxu0 %v380
    %v1259 = vpop.f32.mrf.mxu0
    %v1260 = vadd.f32 %v1247, %v1259
    %v1261 = vpop.f32.mrf.mxu0
    %1262 = vdwg.mxu0
    %1263 = vmatpush.bf16.msra.mxu0 %v933
    %1264 = vmatpush.bf16.msra.mxu0 %v929
    %1265 = vmatpush.bf16.msra.mxu0 %v925
    %1266 = vmatpush.bf16.msra.mxu0 %v921
    %1267 = vmatpush.bf16.msra.mxu0 %v917
    %1268 = vmatpush.bf16.msra.mxu0 %v913
    %1269 = vmatpush.bf16.msra.mxu0 %v909
    %1270 = vmatpush.bf16.msra.mxu0 %v905
    %1271 = vmatmul.bf16.gmra.mxu0 %v377
    %v1272 = vpop.f32.mrf.mxu0
    %v1273 = vadd.f32 %v513, %v1272
    %v1274 = vpop.f32.mrf.mxu0
    %1275 = vdwg.mxu0
    %1276 = vmatpush.bf16.msra.mxu0 %v965
    %1277 = vmatpush.bf16.msra.mxu0 %v961
    %1278 = vmatpush.bf16.msra.mxu0 %v957
    %1279 = vmatpush.bf16.msra.mxu0 %v953
    %1280 = vmatpush.bf16.msra.mxu0 %v949
    %1281 = vmatpush.bf16.msra.mxu0 %v945
    %1282 = vmatpush.bf16.msra.mxu0 %v941
    %1283 = vmatpush.bf16.msra.mxu0 %v937
    %1284 = vmatmul.bf16.gmra.mxu0 %v378
    %v1285 = vpop.f32.mrf.mxu0
    %v1286 = vadd.f32 %v1273, %v1285
    %v1287 = vpop.f32.mrf.mxu0
    %1288 = vdwg.mxu0
    %1289 = vmatpush.bf16.msra.mxu0 %v997
    %1290 = vmatpush.bf16.msra.mxu0 %v993
    %1291 = vmatpush.bf16.msra.mxu0 %v989
    %1292 = vmatpush.bf16.msra.mxu0 %v985
    %1293 = vmatpush.bf16.msra.mxu0 %v981
    %1294 = vmatpush.bf16.msra.mxu0 %v977
    %1295 = vmatpush.bf16.msra.mxu0 %v973
    %1296 = vmatpush.bf16.msra.mxu0 %v969
    %1297 = vmatmul.bf16.gmra.mxu0 %v379
    %v1298 = vpop.f32.mrf.mxu0
    %v1299 = vadd.f32 %v1286, %v1298
    %v1300 = vpop.f32.mrf.mxu0
    %1301 = vdwg.mxu0
    %1302 = vmatpush.bf16.msra.mxu0 %v1029
    %1303 = vmatpush.bf16.msra.mxu0 %v1025
    %1304 = vmatpush.bf16.msra.mxu0 %v1021
    %1305 = vmatpush.bf16.msra.mxu0 %v1017
    %1306 = vmatpush.bf16.msra.mxu0 %v1013
    %1307 = vmatpush.bf16.msra.mxu0 %v1009
    %1308 = vmatpush.bf16.msra.mxu0 %v1005
    %1309 = vmatpush.bf16.msra.mxu0 %v1001
    %1310 = vmatmul.bf16.gmra.mxu0 %v380
    %v1311 = vpop.f32.mrf.mxu0
    %v1312 = vadd.f32 %v1299, %v1311
    %v1313 = vpop.f32.mrf.mxu0
    %1314 = vdwg.mxu0
    %1315 = vmatpush.bf16.msra.mxu0 %v934
    %1316 = vmatpush.bf16.msra.mxu0 %v930
    %1317 = vmatpush.bf16.msra.mxu0 %v926
    %1318 = vmatpush.bf16.msra.mxu0 %v922
    %1319 = vmatpush.bf16.msra.mxu0 %v918
    %1320 = vmatpush.bf16.msra.mxu0 %v914
    %1321 = vmatpush.bf16.msra.mxu0 %v910
    %1322 = vmatpush.bf16.msra.mxu0 %v906
    %1323 = vmatmul.bf16.gmra.mxu0 %v377
    %v1324 = vpop.f32.mrf.mxu0
    %v1325 = vadd.f32 %v514, %v1324
    %v1326 = vpop.f32.mrf.mxu0
    %1327 = vdwg.mxu0
    %1328 = vmatpush.bf16.msra.mxu0 %v966
    %1329 = vmatpush.bf16.msra.mxu0 %v962
    %1330 = vmatpush.bf16.msra.mxu0 %v958
    %1331 = vmatpush.bf16.msra.mxu0 %v954
    %1332 = vmatpush.bf16.msra.mxu0 %v950
    %1333 = vmatpush.bf16.msra.mxu0 %v946
    %1334 = vmatpush.bf16.msra.mxu0 %v942
    %1335 = vmatpush.bf16.msra.mxu0 %v938
    %1336 = vmatmul.bf16.gmra.mxu0 %v378
    %v1337 = vpop.f32.mrf.mxu0
    %v1338 = vadd.f32 %v1325, %v1337
    %v1339 = vpop.f32.mrf.mxu0
    %1340 = vdwg.mxu0
    %1341 = vmatpush.bf16.msra.mxu0 %v998
    %1342 = vmatpush.bf16.msra.mxu0 %v994
    %1343 = vmatpush.bf16.msra.mxu0 %v990
    %1344 = vmatpush.bf16.msra.mxu0 %v986
    %1345 = vmatpush.bf16.msra.mxu0 %v982
    %1346 = vmatpush.bf16.msra.mxu0 %v978
    %1347 = vmatpush.bf16.msra.mxu0 %v974
    %1348 = vmatpush.bf16.msra.mxu0 %v970
    %1349 = vmatmul.bf16.gmra.mxu0 %v379
    %v1350 = vpop.f32.mrf.mxu0
    %v1351 = vadd.f32 %v1338, %v1350
    %v1352 = vpop.f32.mrf.mxu0
    %1353 = vdwg.mxu0
    %1354 = vmatpush.bf16.msra.mxu0 %v1030
    %1355 = vmatpush.bf16.msra.mxu0 %v1026
    %1356 = vmatpush.bf16.msra.mxu0 %v1022
    %1357 = vmatpush.bf16.msra.mxu0 %v1018
    %1358 = vmatpush.bf16.msra.mxu0 %v1014
    %1359 = vmatpush.bf16.msra.mxu0 %v1010
    %1360 = vmatpush.bf16.msra.mxu0 %v1006
    %1361 = vmatpush.bf16.msra.mxu0 %v1002
    %1362 = vmatmul.bf16.gmra.mxu0 %v380
    %v1363 = vpop.f32.mrf.mxu0
    %v1364 = vadd.f32 %v1351, %v1363
    %v1365 = vpop.f32.mrf.mxu0
    %1366 = vdwg.mxu0
    %v1367 = vtanh.pop %v1208
    %v1368 = vtanh.pop %v1260
    %v1369 = vtanh.pop %v1312
    %v1370 = vtanh.pop %v1364
    %v1371 = vld [vmem:[#allocation7] sm:$0xff]
    %v1372 = vld [vmem:[#allocation7 + $0x8] sm:$0xff]
    %v1373 = vld [vmem:[#allocation7 + $0x10] sm:$0xff]
    %v1374 = vld [vmem:[#allocation7 + $0x18] sm:$0xff]
    %v1375 = vpack.c.bf16 %v1371, %v1371
    %v1376 = vpack.c.bf16 %v1372, %v1372
    %v1377 = vpack.c.bf16 %v1373, %v1373
    %v1378 = vpack.c.bf16 %v1374, %v1374
    %1379 = vmatpush.bf16.msra.mxu0 %v931
    %1380 = vmatpush.bf16.msra.mxu0 %v927
    %1381 = vmatpush.bf16.msra.mxu0 %v923
    %1382 = vmatpush.bf16.msra.mxu0 %v919
    %1383 = vmatpush.bf16.msra.mxu0 %v915
    %1384 = vmatpush.bf16.msra.mxu0 %v911
    %1385 = vmatpush.bf16.msra.mxu0 %v907
    %1386 = vmatpush.bf16.msra.mxu0 %v903
    %1387 = vmatmul.bf16.gmra.mxu0 %v1375
    %v1388 = vpop.f32.mrf.mxu0
    %v1389 = vadd.f32 %v511, %v1388
    %v1390 = vpop.f32.mrf.mxu0
    %1391 = vdwg.mxu0
    %1392 = vmatpush.bf16.msra.mxu0 %v963
    %1393 = vmatpush.bf16.msra.mxu0 %v959
    %1394 = vmatpush.bf16.msra.mxu0 %v955
    %1395 = vmatpush.bf16.msra.mxu0 %v951
    %1396 = vmatpush.bf16.msra.mxu0 %v947
    %1397 = vmatpush.bf16.msra.mxu0 %v943
    %1398 = vmatpush.bf16.msra.mxu0 %v939
    %1399 = vmatpush.bf16.msra.mxu0 %v935
    %1400 = vmatmul.bf16.gmra.mxu0 %v1376
    %v1401 = vpop.f32.mrf.mxu0
    %v1402 = vadd.f32 %v1389, %v1401
    %v1403 = vpop.f32.mrf.mxu0
    %1404 = vdwg.mxu0
    %1405 = vmatpush.bf16.msra.mxu0 %v995
    %1406 = vmatpush.bf16.msra.mxu0 %v991
    %1407 = vmatpush.bf16.msra.mxu0 %v987
    %1408 = vmatpush.bf16.msra.mxu0 %v983
    %1409 = vmatpush.bf16.msra.mxu0 %v979
    %1410 = vmatpush.bf16.msra.mxu0 %v975
    %1411 = vmatpush.bf16.msra.mxu0 %v971
    %1412 = vmatpush.bf16.msra.mxu0 %v967
    %1413 = vmatmul.bf16.gmra.mxu0 %v1377
    %v1414 = vpop.f32.mrf.mxu0
    %v1415 = vadd.f32 %v1402, %v1414
    %v1416 = vpop.f32.mrf.mxu0
    %1417 = vdwg.mxu0
    %1418 = vmatpush.bf16.msra.mxu0 %v1027
    %1419 = vmatpush.bf16.msra.mxu0 %v1023
    %1420 = vmatpush.bf16.msra.mxu0 %v1019
    %1421 = vmatpush.bf16.msra.mxu0 %v1015
    %1422 = vmatpush.bf16.msra.mxu0 %v1011
    %1423 = vmatpush.bf16.msra.mxu0 %v1007
    %1424 = vmatpush.bf16.msra.mxu0 %v1003
    %1425 = vmatpush.bf16.msra.mxu0 %v999
    %1426 = vmatmul.bf16.gmra.mxu0 %v1378
    %v1427 = vpop.f32.mrf.mxu0
    %v1428 = vadd.f32 %v1415, %v1427
    %v1429 = vpop.f32.mrf.mxu0
    %1430 = vdwg.mxu0
    %1431 = vmatpush.bf16.msra.mxu0 %v932
    %1432 = vmatpush.bf16.msra.mxu0 %v928
    %1433 = vmatpush.bf16.msra.mxu0 %v924
    %1434 = vmatpush.bf16.msra.mxu0 %v920
    %1435 = vmatpush.bf16.msra.mxu0 %v916
    %1436 = vmatpush.bf16.msra.mxu0 %v912
    %1437 = vmatpush.bf16.msra.mxu0 %v908
    %1438 = vmatpush.bf16.msra.mxu0 %v904
    %1439 = vmatmul.bf16.gmra.mxu0 %v1375
    %v1440 = vpop.f32.mrf.mxu0
    %v1441 = vadd.f32 %v512, %v1440
    %v1442 = vpop.f32.mrf.mxu0
    %1443 = vdwg.mxu0
    %1444 = vmatpush.bf16.msra.mxu0 %v964
    %1445 = vmatpush.bf16.msra.mxu0 %v960
    %1446 = vmatpush.bf16.msra.mxu0 %v956
    %1447 = vmatpush.bf16.msra.mxu0 %v952
    %1448 = vmatpush.bf16.msra.mxu0 %v948
    %1449 = vmatpush.bf16.msra.mxu0 %v944
    %1450 = vmatpush.bf16.msra.mxu0 %v940
    %1451 = vmatpush.bf16.msra.mxu0 %v936
    %1452 = vmatmul.bf16.gmra.mxu0 %v1376
    %v1453 = vpop.f32.mrf.mxu0
    %v1454 = vadd.f32 %v1441, %v1453
    %v1455 = vpop.f32.mrf.mxu0
    %1456 = vdwg.mxu0
    %1457 = vmatpush.bf16.msra.mxu0 %v996
    %1458 = vmatpush.bf16.msra.mxu0 %v992
    %1459 = vmatpush.bf16.msra.mxu0 %v988
    %1460 = vmatpush.bf16.msra.mxu0 %v984
    %1461 = vmatpush.bf16.msra.mxu0 %v980
    %1462 = vmatpush.bf16.msra.mxu0 %v976
    %1463 = vmatpush.bf16.msra.mxu0 %v972
    %1464 = vmatpush.bf16.msra.mxu0 %v968
    %1465 = vmatmul.bf16.gmra.mxu0 %v1377
    %v1466 = vpop.f32.mrf.mxu0
    %v1467 = vadd.f32 %v1454, %v1466
    %v1468 = vpop.f32.mrf.mxu0
    %1469 = vdwg.mxu0
    %1470 = vmatpush.bf16.msra.mxu0 %v1028
    %1471 = vmatpush.bf16.msra.mxu0 %v1024
    %1472 = vmatpush.bf16.msra.mxu0 %v1020
    %1473 = vmatpush.bf16.msra.mxu0 %v1016
    %1474 = vmatpush.bf16.msra.mxu0 %v1012
    %1475 = vmatpush.bf16.msra.mxu0 %v1008
    %1476 = vmatpush.bf16.msra.mxu0 %v1004
    %1477 = vmatpush.bf16.msra.mxu0 %v1000
    %1478 = vmatmul.bf16.gmra.mxu0 %v1378
    %v1479 = vpop.f32.mrf.mxu0
    %v1480 = vadd.f32 %v1467, %v1479
    %v1481 = vpop.f32.mrf.mxu0
    %1482 = vdwg.mxu0
    %1483 = vmatpush.bf16.msra.mxu0 %v933
    %1484 = vmatpush.bf16.msra.mxu0 %v929
    %1485 = vmatpush.bf16.msra.mxu0 %v925
    %1486 = vmatpush.bf16.msra.mxu0 %v921
    %1487 = vmatpush.bf16.msra.mxu0 %v917
    %1488 = vmatpush.bf16.msra.mxu0 %v913
    %1489 = vmatpush.bf16.msra.mxu0 %v909
    %1490 = vmatpush.bf16.msra.mxu0 %v905
    %1491 = vmatmul.bf16.gmra.mxu0 %v1375
    %v1492 = vpop.f32.mrf.mxu0
    %v1493 = vadd.f32 %v513, %v1492
    %v1494 = vpop.f32.mrf.mxu0
    %1495 = vdwg.mxu0
    %1496 = vmatpush.bf16.msra.mxu0 %v965
    %1497 = vmatpush.bf16.msra.mxu0 %v961
    %1498 = vmatpush.bf16.msra.mxu0 %v957
    %1499 = vmatpush.bf16.msra.mxu0 %v953
    %1500 = vmatpush.bf16.msra.mxu0 %v949
    %1501 = vmatpush.bf16.msra.mxu0 %v945
    %1502 = vmatpush.bf16.msra.mxu0 %v941
    %1503 = vmatpush.bf16.msra.mxu0 %v937
    %1504 = vmatmul.bf16.gmra.mxu0 %v1376
    %v1505 = vpop.f32.mrf.mxu0
    %v1506 = vadd.f32 %v1493, %v1505
    %v1507 = vpop.f32.mrf.mxu0
    %1508 = vdwg.mxu0
    %1509 = vmatpush.bf16.msra.mxu0 %v997
    %1510 = vmatpush.bf16.msra.mxu0 %v993
    %1511 = vmatpush.bf16.msra.mxu0 %v989
    %1512 = vmatpush.bf16.msra.mxu0 %v985
    %1513 = vmatpush.bf16.msra.mxu0 %v981
    %1514 = vmatpush.bf16.msra.mxu0 %v977
    %1515 = vmatpush.bf16.msra.mxu0 %v973
    %1516 = vmatpush.bf16.msra.mxu0 %v969
    %1517 = vmatmul.bf16.gmra.mxu0 %v1377
    %v1518 = vpop.f32.mrf.mxu0
    %v1519 = vadd.f32 %v1506, %v1518
    %v1520 = vpop.f32.mrf.mxu0
    %1521 = vdwg.mxu0
    %1522 = vmatpush.bf16.msra.mxu0 %v1029
    %1523 = vmatpush.bf16.msra.mxu0 %v1025
    %1524 = vmatpush.bf16.msra.mxu0 %v1021
    %1525 = vmatpush.bf16.msra.mxu0 %v1017
    %1526 = vmatpush.bf16.msra.mxu0 %v1013
    %1527 = vmatpush.bf16.msra.mxu0 %v1009
    %1528 = vmatpush.bf16.msra.mxu0 %v1005
    %1529 = vmatpush.bf16.msra.mxu0 %v1001
    %1530 = vmatmul.bf16.gmra.mxu0 %v1378
    %v1531 = vpop.f32.mrf.mxu0
    %v1532 = vadd.f32 %v1519, %v1531
    %v1533 = vpop.f32.mrf.mxu0
    %1534 = vdwg.mxu0
    %1535 = vmatpush.bf16.msra.mxu0 %v934
    %1536 = vmatpush.bf16.msra.mxu0 %v930
    %1537 = vmatpush.bf16.msra.mxu0 %v926
    %1538 = vmatpush.bf16.msra.mxu0 %v922
    %1539 = vmatpush.bf16.msra.mxu0 %v918
    %1540 = vmatpush.bf16.msra.mxu0 %v914
    %1541 = vmatpush.bf16.msra.mxu0 %v910
    %1542 = vmatpush.bf16.msra.mxu0 %v906
    %1543 = vmatmul.bf16.gmra.mxu0 %v1375
    %v1544 = vpop.f32.mrf.mxu0
    %v1545 = vadd.f32 %v514, %v1544
    %v1546 = vpop.f32.mrf.mxu0
    %1547 = vdwg.mxu0
    %1548 = vmatpush.bf16.msra.mxu0 %v966
    %1549 = vmatpush.bf16.msra.mxu0 %v962
    %1550 = vmatpush.bf16.msra.mxu0 %v958
    %1551 = vmatpush.bf16.msra.mxu0 %v954
    %1552 = vmatpush.bf16.msra.mxu0 %v950
    %1553 = vmatpush.bf16.msra.mxu0 %v946
    %1554 = vmatpush.bf16.msra.mxu0 %v942
    %1555 = vmatpush.bf16.msra.mxu0 %v938
    %1556 = vmatmul.bf16.gmra.mxu0 %v1376
    %v1557 = vpop.f32.mrf.mxu0
    %v1558 = vadd.f32 %v1545, %v1557
    %v1559 = vpop.f32.mrf.mxu0
    %1560 = vdwg.mxu0
    %1561 = vmatpush.bf16.msra.mxu0 %v998
    %1562 = vmatpush.bf16.msra.mxu0 %v994
    %1563 = vmatpush.bf16.msra.mxu0 %v990
    %1564 = vmatpush.bf16.msra.mxu0 %v986
    %1565 = vmatpush.bf16.msra.mxu0 %v982
    %1566 = vmatpush.bf16.msra.mxu0 %v978
    %1567 = vmatpush.bf16.msra.mxu0 %v974
    %1568 = vmatpush.bf16.msra.mxu0 %v970
    %1569 = vmatmul.bf16.gmra.mxu0 %v1377
    %v1570 = vpop.f32.mrf.mxu0
    %v1571 = vadd.f32 %v1558, %v1570
    %v1572 = vpop.f32.mrf.mxu0
    %1573 = vdwg.mxu0
    %1574 = vmatpush.bf16.msra.mxu0 %v1030
    %1575 = vmatpush.bf16.msra.mxu0 %v1026
    %1576 = vmatpush.bf16.msra.mxu0 %v1022
    %1577 = vmatpush.bf16.msra.mxu0 %v1018
    %1578 = vmatpush.bf16.msra.mxu0 %v1014
    %1579 = vmatpush.bf16.msra.mxu0 %v1010
    %1580 = vmatpush.bf16.msra.mxu0 %v1006
    %1581 = vmatpush.bf16.msra.mxu0 %v1002
    %1582 = vmatmul.bf16.gmra.mxu0 %v1378
    %v1583 = vpop.f32.mrf.mxu0
    %v1584 = vadd.f32 %v1571, %v1583
    %v1585 = vpop.f32.mrf.mxu0
    %1586 = vdwg.mxu0
    %v1587 = vtanh.pop %v1428
    %v1588 = vtanh.pop %v1480
    %v1589 = vtanh.pop %v1532
    %v1590 = vtanh.pop %v1584
    %v1591 = vmul.f32 %v369, %v369
    %v1592 = vmul.f32 %v370, %v370
    %v1593 = vmul.f32 %v371, %v371
    %v1594 = vmul.f32 %v372, %v372
    %v1595 = vadd.f32 %v1591, %v1592
    %v1596 = vadd.f32 %v1595, %v1593
    %v1597 = vadd.f32 %v1596, %v1594
    %1598 = vadd.xlane.f32.xlu0 %v1597
    %v1599 = vpop.xlane.xlu0 %1598
    %v1600 = vmul.f32 %v1367, %v1367
    %v1601 = vmul.f32 %v1368, %v1368
    %v1602 = vmul.f32 %v1369, %v1369
    %v1603 = vmul.f32 %v1370, %v1370
    %v1604 = vadd.f32 %v1600, %v1601
    %v1605 = vadd.f32 %v1604, %v1602
    %v1606 = vadd.f32 %v1605, %v1603
    %1607 = vadd.xlane.f32.xlu0 %v1606
    %v1608 = vpop.xlane.xlu0 %1607
    %v1609 = vmul.f32 %v1587, %v1587
    %v1610 = vmul.f32 %v1588, %v1588
    %v1611 = vmul.f32 %v1589, %v1589
    %v1612 = vmul.f32 %v1590, %v1590
    %v1613 = vadd.f32 %v1609, %v1610
    %v1614 = vadd.f32 %v1613, %v1611
    %v1615 = vadd.f32 %v1614, %v1612
    %1616 = vadd.xlane.f32.xlu0 %v1615
    %v1617 = vpop.xlane.xlu0 %1616
    %v1618 = vmul.f32 %v369, %v1367
    %v1619 = vmul.f32 %v370, %v1368
    %v1620 = vmul.f32 %v371, %v1369
    %v1621 = vmul.f32 %v372, %v1370
    %v1622 = vadd.f32 %v1618, %v1619
    %v1623 = vadd.f32 %v1622, %v1620
    %v1624 = vadd.f32 %v1623, %v1621
    %1625 = vadd.xlane.f32.xlu0 %v1624
    %v1626 = vpop.xlane.xlu0 %1625
    %v1627 = vmul.f32 %v369, %v1587
    %v1628 = vmul.f32 %v370, %v1588
    %v1629 = vmul.f32 %v371, %v1589
    %v1630 = vmul.f32 %v372, %v1590
    %v1631 = vadd.f32 %v1627, %v1628
    %v1632 = vadd.f32 %v1631, %v1629
    %v1633 = vadd.f32 %v1632, %v1630
    %1634 = vadd.xlane.f32.xlu0 %v1633
    %v1635 = vpop.xlane.xlu0 %1634
    %v1636 = vmul.f32 %v1599, %v1608
    %v1637 = vmax.f32 %v1636, 1e-16
    %v1638 = vrsqrt.pop %v1637
    %v1639 = vmul.f32 %v1638, %v1637
    %v1640 = vmul.f32 %v1639, %v1638
    %v1641 = vmul.f32 0.5, %v1640
    %v1642 = vsub.f32 1.5, %v1641
    %v1643 = vmul.f32 %v1638, %v1642
    %vm1644 = vweird.f32 %v1637
    %vm1645 = vweird.f32 %v1638
    %vm1646 = vmor %vm1644, %vm1645
    %v1647 = vsel %vm1646, %v1638, %v1643
    %v1648 = vmul.f32 %v1626, %v1647
    %v1649 = vmul.f32 %v1599, %v1617
    %v1650 = vmax.f32 %v1649, 1e-16
    %v1651 = vrsqrt.pop %v1650
    %v1652 = vmul.f32 %v1651, %v1650
    %v1653 = vmul.f32 %v1652, %v1651
    %v1654 = vmul.f32 0.5, %v1653
    %v1655 = vsub.f32 1.5, %v1654
    %v1656 = vmul.f32 %v1651, %v1655
    %vm1657 = vweird.f32 %v1650
    %vm1658 = vweird.f32 %v1651
    %vm1659 = vmor %vm1657, %vm1658
    %v1660 = vsel %vm1659, %v1651, %v1656
    %v1661 = vmul.f32 %v1635, %v1660
    %v1663 = vlaneseq
    %v1664 = vand.u32 %v1663, 127
    %v1665 = vperm.slane %v1648, %v1664
    %v1668 = vperm.slane %v1661, %v1664
    %vm1670 = vcmask 1040384
    %v1671 = vsel %vm1670, %v1665, %v1668
    %vm1672 = vcmask 58368
    %1673 = vst.msk [vmem:[#allocation13] sm:$0x3] %vm1672, %v1671
    // Predicated region
    $region54: #{tpu_custom_call.1} parent=1 // pred_check
      _
    $region55: #{tpu_custom_call.1} parent=1 // pred_check_branch
      %1675 = sbr.rel (0) target = $region57
    $region56: #{tpu_custom_call.1} parent=1 // pred_region
      %1677 = vsyncadd [#allocation4], 0
      %s1679 = sshll.u32 [#allocation13], 4
      %s1680 = int_to_ptr.vmem [resolvable:$true] %s1679
      %s1681 = sshll.u32 %s7, 4
      %s1682 = int_to_ptr.hbm [resolvable:$true] %s1681
      %1684 = dma.vmem_to_hbm [thread:$0]  %s1680, 32, %s1682, [#allocation4]
    $region57: #{tpu_custom_call.1} parent=1 // pred_fallthru
      _
    // Predicated region
    $region58: #{tpu_custom_call.1} parent=1 // pred_check
      _
    $region59: #{tpu_custom_call.1} parent=1 // pred_check_branch
      %1686 = sbr.rel (0) target = $region61
    $region60: #{tpu_custom_call.1} parent=1 // pred_region
      %1688 = dma.done [#allocation4], 32
    $region61: #{tpu_custom_call.1} parent=1 // pred_fallthru
      _
    %1689 = vsyncpa [#allocation3], 1
    %1690 = vsyncpa [#allocation6], 1
    %1691 = vsyncpa [#allocation9], 1
    %1692 = vsyncpa [#allocation12], 1
    %1693 = vsyncpa [#allocation4], 1

</llo_original>
